<compile_context>
chip_gen: v7x
topology: tpu7x:2x2x1
jax: 0.10.0
libtpu: 0.0.40
codegen_flags: <defaults>
</compile_context>

<pallas_src>
import functools

import jax
import jax.numpy as jnp
from jax.experimental import pallas as pl
from jax.experimental.pallas import tpu as pltpu

LANE = 128  # padded width for feature / hidden / class dims (lane-dense)


def _round_up(x, m):
    return ((x + m - 1) // m) * m


def _pick_tile(n, candidates):
    for c in candidates:
        if n % c == 0:
            return c
    return n


# ----------------------------------------------------------------------------
# Fused 2-layer MPNN kernel.  Grid = (layer, k (reduction), i (output rows)).
# ----------------------------------------------------------------------------
def _fused_mpnn_kernel(a_ref, x_ref, w_ref, b_ref, invdeg_ref, o_ref,
                       z_ref, acc_ref, h1_ref, *, nclass):
    l = pl.program_id(0)          # 0: mpnn1 + relu, 1: mpnn2 + log_softmax
    k = pl.program_id(1)          # reduction (source-node / A-column) tile
    i = pl.program_id(2)          # output node-row tile
    nk = pl.num_programs(1)

    tm = a_ref.shape[0]
    tk = a_ref.shape[1]
    row = pl.multiple_of(i * tm, tm)

    # ---- Hoisted linear transform: z_k = src_k @ W_l, once per (layer, k). ----
    @pl.when(jnp.logical_and(i == 0, l == 0))
    def _z_from_x():
        z_ref[...] = jnp.dot(
            x_ref[...], w_ref[...],
            preferred_element_type=jnp.float32).astype(z_ref.dtype)

    @pl.when(jnp.logical_and(i == 0, l == 1))
    def _z_from_h1():
        src = h1_ref[pl.ds(pl.multiple_of(k * tk, tk), tk), :]
        z_ref[...] = jnp.dot(
            src, w_ref[...],
            preferred_element_type=jnp.float32).astype(z_ref.dtype)

    # ---- Aggregation: acc[rows(i)] (+)= counts(A)[i, k] @ z_k  (f32 acc). -----
    part = jnp.dot(a_ref[...], z_ref[...], preferred_element_type=jnp.float32)

    @pl.when(k == 0)
    def _acc_init():
        acc_ref[pl.ds(row, tm), :] = part

    @pl.when(k > 0)
    def _acc_update():
        acc_ref[pl.ds(row, tm), :] += part

    # ---- Epilogues on the last reduction step: 1/deg scaling + bias + nonlin. --
    @pl.when(jnp.logical_and(l == 0, k == nk - 1))
    def _finish_layer1():
        h = acc_ref[pl.ds(row, tm), :] * invdeg_ref[...] + b_ref[...]
        h1_ref[pl.ds(row, tm), :] = jnp.maximum(h, 0.0).astype(h1_ref.dtype)

    @pl.when(jnp.logical_and(l == 1, k == nk - 1))
    def _finish_layer2():
        h = acc_ref[pl.ds(row, tm), :] * invdeg_ref[...] + b_ref[...]
        col = jax.lax.broadcasted_iota(jnp.int32, h.shape, 1)
        valid = col < nclass
        h = jnp.where(valid, h, -jnp.inf)         # mask padded class columns
        m = jnp.max(h, axis=1, keepdims=True)
        s = h - m
        lse = jnp.log(jnp.sum(jnp.exp(s), axis=1, keepdims=True))
        o_ref[...] = jnp.where(valid, s - lse, 0.0).astype(o_ref.dtype)


# ----------------------------------------------------------------------------
# Dense neighbor-count matrix (duplicate-edge multiplicity + self loops) and
# in-degree, matching PyG MessagePassing(aggr='mean') after add_self_loops.
# ----------------------------------------------------------------------------
def build_count_adjacency(edge_index, num_nodes):
    src, dst = edge_index[0], edge_index[1]
    counts = jnp.zeros((num_nodes, num_nodes), jnp.float32)
    counts = counts.at[dst, src].add(1.0)
    counts = counts + jnp.eye(num_nodes, dtype=jnp.float32)   # add_self_loops
    deg = jnp.sum(counts, axis=1, keepdims=True)
    return counts, deg


# ----------------------------------------------------------------------------
# Forward: mpnn1 -> relu -> dropout(identity, eval) -> mpnn2 -> log_softmax.
# ----------------------------------------------------------------------------
def mpnn_net_forward(x, edge_index, params):
    n, nfeat = x.shape
    nhid = params["w1"].shape[1]
    nclass = params["w2"].shape[1]
    # TODO(synk): feature/hidden/class dims > 128 would need an extra feature-tile axis.
    assert max(nfeat, nhid, nclass) <= LANE

    counts, deg = build_count_adjacency(edge_index, n)

    n_pad = _round_up(n, LANE)
    # Bigger tiles amortize the ~0.35us per-grid-step overhead; cap the A double
    # buffer at 16 MiB so the footprint stays v7x-safe.
    tm = _pick_tile(n_pad, (512, 256, 128))                        # output row tile
    tk_cands = tuple(c for c in (4096, 2048, 1024, 512, 256, 128)
                     if 2 * tm * c * 2 <= (16 << 20))
    tk = _pick_tile(n_pad, tk_cands)                               # reduction tile
    ni, nk = n_pad // tm, n_pad // tk
    last_k = nk - 1

    # Lane-dense padded operands.  A carries raw counts (exact in bf16); the exact
    # f32 1/deg normalization is applied in the kernel epilogue.
    a_pad = jnp.zeros((n_pad, n_pad), jnp.bfloat16).at[:n, :n].set(
        counts.astype(jnp.bfloat16))
    x_pad = jnp.zeros((n_pad, LANE), jnp.bfloat16).at[:n, :nfeat].set(
        x.astype(jnp.bfloat16))
    w = jnp.zeros((2, LANE, LANE), jnp.bfloat16)
    w = w.at[0, :nfeat, :nhid].set(params["w1"].astype(jnp.bfloat16))
    w = w.at[1, :nhid, :nclass].set(params["w2"].astype(jnp.bfloat16))
    b = jnp.zeros((2, 1, LANE), jnp.float32)
    b = b.at[0, 0, :nhid].set(params["b1"])
    b = b.at[1, 0, :nclass].set(params["b2"])
    inv_deg = jnp.ones((n_pad, 1), jnp.float32).at[:n].set(1.0 / deg)

    # VMEM budget from the actual buffers (double-buffered inputs + scratch), clamped
    # to <= 40 MiB so it also fits comfortably on v7x (64 MiB physical VMEM).
    vmem_budget = (2 * tm * tk * 2            # A tiles (bf16, double buffered)
                   + 2 * tk * LANE * 2        # X tiles
                   + 2 * LANE * LANE * 2      # W
                   + 2 * 1 * LANE * 4         # b
                   + 2 * tm * 1 * 4           # inv_deg
                   + 2 * tm * LANE * 4        # output tiles
                   + tk * LANE * 2            # z scratch
                   + n_pad * LANE * 4         # f32 accumulator
                   + n_pad * LANE * 2)        # H1 scratch
    vmem_limit = int(min(max(2 * vmem_budget, 32 << 20), 40 << 20))

    kernel = functools.partial(_fused_mpnn_kernel, nclass=nclass)

    out = pl.pallas_call(
        kernel,
        out_shape=jax.ShapeDtypeStruct((n_pad, LANE), jnp.float32),
        grid_spec=pltpu.PrefetchScalarGridSpec(
            num_scalar_prefetch=0,
            grid=(2, nk, ni),                 # (layer, reduction k, output-row i)
            in_specs=[
                # A counts tile: rows follow the output row tile, cols the reduction tile.
                pl.BlockSpec((tm, tk), lambda l, k, i: (i, k)),
                # X tile: consumed only in layer 0; pinned to block 0 during layer 1.
                pl.BlockSpec((tk, LANE), lambda l, k, i: (k * (1 - l), 0)),
                # Per-layer weight / bias; the layer dim is squeezed out of the kernel ref.
                pl.BlockSpec((None, LANE, LANE), lambda l, k, i: (l, 0, 0)),
                pl.BlockSpec((None, 1, LANE), lambda l, k, i: (l, 0, 0)),
                # Exact f32 1/deg row scaling, used only in the epilogues.
                pl.BlockSpec((tm, 1), lambda l, k, i: (i, 0)),
            ],
            # The output block index only advances on the steps that actually write
            # (layer 1, last k), so no uninitialized block is ever flushed to HBM.
            out_specs=pl.BlockSpec((tm, LANE),
                                   lambda l, k, i: (i * l * (k == last_k), 0)),
            scratch_shapes=[
                pltpu.VMEM((tk, LANE), jnp.bfloat16),      # z_k = src_k @ W_l (hoisted)
                pltpu.VMEM((n_pad, LANE), jnp.float32),    # full-height f32 accumulator
                pltpu.VMEM((n_pad, LANE), jnp.bfloat16),   # H1: never round-trips HBM
            ],
        ),
        compiler_params=pltpu.CompilerParams(
            # Layer 1 consumes H1 rows from every row tile and z_k is shared across i,
            # so no axis can be megacore-sharded in this fused formulation.
            dimension_semantics=("arbitrary", "arbitrary", "arbitrary"),
            vmem_limit_bytes=vmem_limit,
        ),
    )(a_pad, x_pad, w, b, inv_deg)
    return out[:n, :nclass]


# ----------------------------------------------------------------------------
# Pure-JAX f32 reference (for correctness check only).
# ----------------------------------------------------------------------------
def mpnn_net_reference(x, edge_index, params):
    counts, deg = build_count_adjacency(edge_index, x.shape[0])
    a = counts / deg
    h = jnp.maximum(a @ (x @ params["w1"] + params["b1"]), 0.0)
    logits = a @ (h @ params["w2"] + params["b2"])
    return jax.nn.log_softmax(logits, axis=1)


def init_params(key, nfeat, nhid, nclass):
    k1, k2, k3, k4 = jax.random.split(key, 4)
    # PyTorch Linear stores weight as (out, in); we use the (in, out) transpose.
    w1 = jax.random.normal(k1, (nfeat, nhid), jnp.float32) * 0.1
    b1 = jax.random.normal(k2, (nhid,), jnp.float32) * 0.1
    w2 = jax.random.normal(k3, (nhid, nclass), jnp.float32) * 0.1
    b2 = jax.random.normal(k4, (nclass,), jnp.float32) * 0.1
    return {"w1": w1, "b1": b1, "w2": w2, "b2": b2}


if __name__ == "__main__":
    # Small synthetic graph consistent with the module (Reddit-like node classification).
    num_nodes, nfeat, nhid, nclass, num_edges = 64, 32, 16, 8, 256

    key = jax.random.PRNGKey(0)
    kx, ke, kp = jax.random.split(key, 3)
    x = jax.random.normal(kx, (num_nodes, nfeat), jnp.float32)
    edge_index = jax.random.randint(ke, (2, num_edges), 0, num_nodes, jnp.int32)
    params = init_params(kp, nfeat, nhid, nclass)

    out = jax.jit(mpnn_net_forward)(x, edge_index, params)
    out = jax.block_until_ready(out)

    assert out.shape == (num_nodes, nclass)
    # log_softmax rows exponentiate-sum to 1 (epilogue runs in f32).
    assert bool(jnp.allclose(jnp.sum(jnp.exp(out), axis=1), 1.0, atol=1e-3))
    # Matches the pure-f32 reference up to bf16 MXU-input precision.
    ref = mpnn_net_reference(x, edge_index, params)
    assert bool(jnp.allclose(out, ref, atol=5e-2)), float(jnp.max(jnp.abs(out - ref)))

    print("KERNEL_OK")
</pallas_src>

<mosaic_0001>
module attributes {stable_mosaic.version = 11 : i64} {
  func.func private @main(%arg0: i32) attributes {dimension_semantics = [#tpu.dimension_semantics<core_parallel>], iteration_bounds = array<i64: 2>, tpu.core_type = #tpu.core_type<sc_scalar_subcore>, window_params = []} {
    return
  }
}

module attributes {stable_mosaic.version = 11 : i64} {
  func.func private @main(%arg0: i32) attributes {dimension_semantics = [#tpu.dimension_semantics<core_parallel>], iteration_bounds = array<i64: 2>, tpu.core_type = #tpu.core_type<sc_scalar_subcore>, window_params = []} {
    return
  }
}

module attributes {stable_mosaic.version = 11 : i64} {
  func.func @_fused_mpnn_kernel(%arg0: i32, %arg1: i32, %arg2: i32, %arg3: memref<128x128xbf16, #tpu.memory_space<vmem>>, %arg4: memref<128x128xbf16, #tpu.memory_space<vmem>>, %arg5: memref<1x128x128xbf16, #tpu.memory_space<vmem>>, %arg6: memref<1x1x128xf32, #tpu.memory_space<vmem>>, %arg7: memref<128x1xf32, #tpu.memory_space<vmem>>, %arg8: memref<128x128xf32, #tpu.memory_space<vmem>>, %arg9: memref<128x128xbf16, #tpu.memory_space<vmem>>, %arg10: memref<128x128xf32, #tpu.memory_space<vmem>>, %arg11: memref<128x128xbf16, #tpu.memory_space<vmem>>) attributes {dimension_semantics = [#tpu.dimension_semantics<arbitrary>, #tpu.dimension_semantics<arbitrary>, #tpu.dimension_semantics<arbitrary>], iteration_bounds = array<i64: 2, 1, 1>, scalar_prefetch = 0 : i64, scratch_operands = 3 : i64, tpu.core_type = #tpu.core_type<tc>, window_params = [{transform_indices = @transform_0, window_bounds = array<i64: 128, 128>}, {transform_indices = @transform_1, window_bounds = array<i64: 128, 128>}, {transform_indices = @transform_2, window_bounds = array<i64: 1, 128, 128>}, {transform_indices = @transform_3, window_bounds = array<i64: 1, 1, 128>}, {transform_indices = @transform_4, window_bounds = array<i64: 128, 1>}, {transform_indices = @transform_5, window_bounds = array<i64: 128, 128>}]} {
    %c128_i32 = arith.constant 128 : i32
    %0 = arith.muli %arg2, %c128_i32 : i32
    %1 = tpu.assume_multiple %0, 128 : i32
    %c0_i32 = arith.constant 0 : i32
    %2 = arith.cmpi eq, %arg2, %c0_i32 : i32
    %c0_i32_0 = arith.constant 0 : i32
    %3 = arith.cmpi eq, %arg0, %c0_i32_0 : i32
    %4 = arith.andi %2, %3 : i1
    %5 = arith.extui %4 : i1 to i32
    %c0_i32_1 = arith.constant 0 : i32
    %6 = arith.cmpi ne, %5, %c0_i32_1 : i32
    scf.if %6 {
      %c0_17 = arith.constant 0 : index
      %c0_18 = arith.constant 0 : index
      %31 = vector.load %arg4[%c0_17, %c0_18] : memref<128x128xbf16, #tpu.memory_space<vmem>>, vector<128x128xbf16>
      %c0_19 = arith.constant 0 : index
      %c0_20 = arith.constant 0 : index
      %c0_21 = arith.constant 0 : index
      %32 = vector.load %arg5[%c0_19, %c0_20, %c0_21] : memref<1x128x128xbf16, #tpu.memory_space<vmem>>, vector<1x128x128xbf16>
      %33 = vector.shape_cast %32 : vector<1x128x128xbf16> to vector<128x128xbf16>
      %cst_22 = arith.constant dense<0.000000e+00> : vector<128x128xf32>
      %34 = tpu.matmul %31, %33, %cst_22 {dimension_numbers = #tpu.dot_dimension_numbers<[1], [0], [0], [1], [0, 0, 1, 1], [], []>} : vector<128x128xbf16>, vector<128x128xbf16>, vector<128x128xf32> -> vector<128x128xf32>
      %35 = arith.truncf %34 : vector<128x128xf32> to vector<128x128xbf16>
      %c0_23 = arith.constant 0 : index
      %c0_24 = arith.constant 0 : index
      %36 = vector.load %arg9[%c0_23, %c0_24] : memref<128x128xbf16, #tpu.memory_space<vmem>>, vector<128x128xbf16>
      tpu.vector_store %arg9[%c0_23, %c0_24], %35 {strides = array<i32>} : memref<128x128xbf16, #tpu.memory_space<vmem>>, vector<128x128xbf16>,
    } else {
    }
    %c0_i32_2 = arith.constant 0 : i32
    %7 = arith.cmpi eq, %arg2, %c0_i32_2 : i32
    %c1_i32 = arith.constant 1 : i32
    %8 = arith.cmpi eq, %arg0, %c1_i32 : i32
    %9 = arith.andi %7, %8 : i1
    %10 = arith.extui %9 : i1 to i32
    %c0_i32_3 = arith.constant 0 : i32
    %11 = arith.cmpi ne, %10, %c0_i32_3 : i32
    scf.if %11 {
      %c128_i32_17 = arith.constant 128 : i32
      %31 = arith.muli %arg1, %c128_i32_17 : i32
      %32 = tpu.assume_multiple %31, 128 : i32
      %33 = arith.index_cast %32 : i32 to index
      %c0_18 = arith.constant 0 : index
      %34 = vector.load %arg11[%33, %c0_18] : memref<128x128xbf16, #tpu.memory_space<vmem>>, vector<128x128xbf16>
      %c0_19 = arith.constant 0 : index
      %c0_20 = arith.constant 0 : index
      %c0_21 = arith.constant 0 : index
      %35 = vector.load %arg5[%c0_19, %c0_20, %c0_21] : memref<1x128x128xbf16, #tpu.memory_space<vmem>>, vector<1x128x128xbf16>
      %36 = vector.shape_cast %35 : vector<1x128x128xbf16> to vector<128x128xbf16>
      %cst_22 = arith.constant dense<0.000000e+00> : vector<128x128xf32>
      %37 = tpu.matmul %34, %36, %cst_22 {dimension_numbers = #tpu.dot_dimension_numbers<[1], [0], [0], [1], [0, 0, 1, 1], [], []>} : vector<128x128xbf16>, vector<128x128xbf16>, vector<128x128xf32> -> vector<128x128xf32>
      %38 = arith.truncf %37 : vector<128x128xf32> to vector<128x128xbf16>
      %c0_23 = arith.constant 0 : index
      %c0_24 = arith.constant 0 : index
      %39 = vector.load %arg9[%c0_23, %c0_24] : memref<128x128xbf16, #tpu.memory_space<vmem>>, vector<128x128xbf16>
      tpu.vector_store %arg9[%c0_23, %c0_24], %38 {strides = array<i32>} : memref<128x128xbf16, #tpu.memory_space<vmem>>, vector<128x128xbf16>,
    } else {
    }
    %c0 = arith.constant 0 : index
    %c0_4 = arith.constant 0 : index
    %12 = vector.load %arg3[%c0, %c0_4] : memref<128x128xbf16, #tpu.memory_space<vmem>>, vector<128x128xbf16>
    %c0_5 = arith.constant 0 : index
    %c0_6 = arith.constant 0 : index
    %13 = vector.load %arg9[%c0_5, %c0_6] : memref<128x128xbf16, #tpu.memory_space<vmem>>, vector<128x128xbf16>
    %cst = arith.constant dense<0.000000e+00> : vector<128x128xf32>
    %14 = tpu.matmul %12, %13, %cst {dimension_numbers = #tpu.dot_dimension_numbers<[1], [0], [0], [1], [0, 0, 1, 1], [], []>} : vector<128x128xbf16>, vector<128x128xbf16>, vector<128x128xf32> -> vector<128x128xf32>
    %c0_i32_7 = arith.constant 0 : i32
    %15 = arith.cmpi eq, %arg1, %c0_i32_7 : i32
    %16 = arith.extui %15 : i1 to i32
    %c0_i32_8 = arith.constant 0 : i32
    %17 = arith.cmpi ne, %16, %c0_i32_8 : i32
    scf.if %17 {
      %31 = arith.index_cast %1 : i32 to index
      %c0_17 = arith.constant 0 : index
      %32 = vector.load %arg10[%31, %c0_17] : memref<128x128xf32, #tpu.memory_space<vmem>>, vector<128x128xf32>
      tpu.vector_store %arg10[%31, %c0_17], %14 {strides = array<i32>} : memref<128x128xf32, #tpu.memory_space<vmem>>, vector<128x128xf32>,
    } else {
    }
    %c0_i32_9 = arith.constant 0 : i32
    %18 = arith.cmpi sgt, %arg1, %c0_i32_9 : i32
    %19 = arith.extui %18 : i1 to i32
    %c0_i32_10 = arith.constant 0 : i32
    %20 = arith.cmpi ne, %19, %c0_i32_10 : i32
    scf.if %20 {
      %31 = arith.index_cast %1 : i32 to index
      %c0_17 = arith.constant 0 : index
      %32 = vector.load %arg10[%31, %c0_17] : memref<128x128xf32, #tpu.memory_space<vmem>>, vector<128x128xf32>
      %33 = arith.addf %32, %14 : vector<128x128xf32>
      %34 = arith.index_cast %1 : i32 to index
      %c0_18 = arith.constant 0 : index
      %35 = vector.load %arg10[%34, %c0_18] : memref<128x128xf32, #tpu.memory_space<vmem>>, vector<128x128xf32>
      tpu.vector_store %arg10[%34, %c0_18], %33 {strides = array<i32>} : memref<128x128xf32, #tpu.memory_space<vmem>>, vector<128x128xf32>,
    } else {
    }
    %c0_i32_11 = arith.constant 0 : i32
    %21 = arith.cmpi eq, %arg0, %c0_i32_11 : i32
    %c0_i32_12 = arith.constant 0 : i32
    %22 = arith.cmpi eq, %arg1, %c0_i32_12 : i32
    %23 = arith.andi %21, %22 : i1
    %24 = arith.extui %23 : i1 to i32
    %c0_i32_13 = arith.constant 0 : i32
    %25 = arith.cmpi ne, %24, %c0_i32_13 : i32
    scf.if %25 {
      %31 = arith.index_cast %1 : i32 to index
      %c0_17 = arith.constant 0 : index
      %32 = vector.load %arg10[%31, %c0_17] : memref<128x128xf32, #tpu.memory_space<vmem>>, vector<128x128xf32>
      %c0_18 = arith.constant 0 : index
      %c0_19 = arith.constant 0 : index
      %33 = vector.load %arg7[%c0_18, %c0_19] : memref<128x1xf32, #tpu.memory_space<vmem>>, vector<128x1xf32>
      %34 = vector.broadcast %33 : vector<128x1xf32> to vector<128x128xf32>
      %35 = arith.mulf %32, %34 : vector<128x128xf32>
      %c0_20 = arith.constant 0 : index
      %c0_21 = arith.constant 0 : index
      %c0_22 = arith.constant 0 : index
      %36 = vector.load %arg6[%c0_20, %c0_21, %c0_22] : memref<1x1x128xf32, #tpu.memory_space<vmem>>, vector<1x1x128xf32>
      %37 = vector.shape_cast %36 : vector<1x1x128xf32> to vector<1x128xf32>
      %38 = vector.broadcast %37 : vector<1x128xf32> to vector<128x128xf32>
      %39 = arith.addf %35, %38 : vector<128x128xf32>
      %cst_23 = arith.constant 0.000000e+00 : f32
      %40 = vector.broadcast %cst_23 : f32 to vector<128x128xf32>
      %41 = arith.maximumf %39, %40 : vector<128x128xf32>
      %42 = arith.truncf %41 : vector<128x128xf32> to vector<128x128xbf16>
      %43 = arith.index_cast %1 : i32 to index
      %c0_24 = arith.constant 0 : index
      %44 = vector.load %arg11[%43, %c0_24] : memref<128x128xbf16, #tpu.memory_space<vmem>>, vector<128x128xbf16>
      tpu.vector_store %arg11[%43, %c0_24], %42 {strides = array<i32>} : memref<128x128xbf16, #tpu.memory_space<vmem>>, vector<128x128xbf16>,
    } else {
    }
    %c1_i32_14 = arith.constant 1 : i32
    %26 = arith.cmpi eq, %arg0, %c1_i32_14 : i32
    %c0_i32_15 = arith.constant 0 : i32
    %27 = arith.cmpi eq, %arg1, %c0_i32_15 : i32
    %28 = arith.andi %26, %27 : i1
    %29 = arith.extui %28 : i1 to i32
    %c0_i32_16 = arith.constant 0 : i32
    %30 = arith.cmpi ne, %29, %c0_i32_16 : i32
    scf.if %30 {
      %31 = arith.index_cast %1 : i32 to index
      %c0_17 = arith.constant 0 : index
      %32 = vector.load %arg10[%31, %c0_17] : memref<128x128xf32, #tpu.memory_space<vmem>>, vector<128x128xf32>
      %c0_18 = arith.constant 0 : index
      %c0_19 = arith.constant 0 : index
      %33 = vector.load %arg7[%c0_18, %c0_19] : memref<128x1xf32, #tpu.memory_space<vmem>>, vector<128x1xf32>
      %34 = vector.broadcast %33 : vector<128x1xf32> to vector<128x128xf32>
      %35 = arith.mulf %32, %34 : vector<128x128xf32>
      %c0_20 = arith.constant 0 : index
      %c0_21 = arith.constant 0 : index
      %c0_22 = arith.constant 0 : index
      %36 = vector.load %arg6[%c0_20, %c0_21, %c0_22] : memref<1x1x128xf32, #tpu.memory_space<vmem>>, vector<1x1x128xf32>
      %37 = vector.shape_cast %36 : vector<1x1x128xf32> to vector<1x128xf32>
      %38 = vector.broadcast %37 : vector<1x128xf32> to vector<128x128xf32>
      %39 = arith.addf %35, %38 : vector<128x128xf32>
      %40 = tpu.iota {dimensions = array<i32: 1>} : vector<128x128xi32>
      %c8_i32 = arith.constant 8 : i32
      %41 = vector.broadcast %c8_i32 : i32 to vector<128x128xi32>
      %42 = arith.cmpi slt, %40, %41 : vector<128x128xi32>
      %cst_23 = arith.constant 0xFF800000 : f32
      %43 = vector.broadcast %cst_23 : f32 to vector<128x128xf32>
      %44 = arith.select %42, %39, %43 : vector<128x128xi1>, vector<128x128xf32>
      %cst_24 = arith.constant dense<0xFF800000> : vector<128xf32>
      %45 = vector.multi_reduction <maximumf>, %44, %cst_24 [1] : vector<128x128xf32> to vector<128xf32>
      %46 = vector.shape_cast %45 : vector<128xf32> to vector<128x1xf32>
      %47 = vector.broadcast %46 : vector<128x1xf32> to vector<128x128xf32>
      %48 = arith.subf %44, %47 : vector<128x128xf32>
      %49 = math.exp %48 : vector<128x128xf32>
      %cst_25 = arith.constant dense<0.000000e+00> : vector<128xf32>
      %50 = vector.multi_reduction <add>, %49, %cst_25 [1] : vector<128x128xf32> to vector<128xf32>
      %51 = vector.shape_cast %50 : vector<128xf32> to vector<128x1xf32>
      %52 = math.log %51 : vector<128x1xf32>
      %53 = vector.broadcast %52 : vector<128x1xf32> to vector<128x128xf32>
      %54 = arith.subf %48, %53 : vector<128x128xf32>
      %cst_26 = arith.constant 0.000000e+00 : f32
      %55 = vector.broadcast %cst_26 : f32 to vector<128x128xf32>
      %56 = arith.select %42, %54, %55 : vector<128x128xi1>, vector<128x128xf32>
      %c0_27 = arith.constant 0 : index
      %c0_28 = arith.constant 0 : index
      %57 = vector.load %arg8[%c0_27, %c0_28] : memref<128x128xf32, #tpu.memory_space<vmem>>, vector<128x128xf32>
      tpu.vector_store %arg8[%c0_27, %c0_28], %56 {strides = array<i32>} : memref<128x128xf32, #tpu.memory_space<vmem>>, vector<128x128xf32>,
    } else {
    }
    return
  }
  func.func @transform_0(%arg0: i32, %arg1: i32, %arg2: i32) -> (i32, i32) {
    %c0_i32 = arith.constant 0 : i32
    return %arg2, %arg1 : i32, i32
  }
  func.func @transform_1(%arg0: i32, %arg1: i32, %arg2: i32) -> (i32, i32) {
    %c1_i32 = arith.constant 1 : i32
    %0 = arith.subi %c1_i32, %arg0 : i32
    %1 = arith.muli %arg1, %0 : i32
    %c0_i32 = arith.constant 0 : i32
    %c0_i32_0 = arith.constant 0 : i32
    return %1, %c0_i32 : i32, i32
  }
  func.func @transform_2(%arg0: i32, %arg1: i32, %arg2: i32) -> (i32, i32, i32) {
    %c0_i32 = arith.constant 0 : i32
    %c0_i32_0 = arith.constant 0 : i32
    %c0_i32_1 = arith.constant 0 : i32
    return %arg0, %c0_i32, %c0_i32_0 : i32, i32, i32
  }
  func.func @transform_3(%arg0: i32, %arg1: i32, %arg2: i32) -> (i32, i32, i32) {
    %c0_i32 = arith.constant 0 : i32
    %c0_i32_0 = arith.constant 0 : i32
    %c0_i32_1 = arith.constant 0 : i32
    return %arg0, %c0_i32, %c0_i32_0 : i32, i32, i32
  }
  func.func @transform_4(%arg0: i32, %arg1: i32, %arg2: i32) -> (i32, i32) {
    %c0_i32 = arith.constant 0 : i32
    %c0_i32_0 = arith.constant 0 : i32
    return %arg2, %c0_i32 : i32, i32
  }
  func.func @transform_5(%arg0: i32, %arg1: i32, %arg2: i32) -> (i32, i32) {
    %0 = arith.muli %arg2, %arg0 : i32
    %c0_i32 = arith.constant 0 : i32
    %1 = arith.cmpi eq, %arg1, %c0_i32 : i32
    %2 = arith.extui %1 : i1 to i32
    %3 = arith.muli %0, %2 : i32
    %c0_i32_0 = arith.constant 0 : i32
    %c0_i32_1 = arith.constant 0 : i32
    return %3, %c0_i32_0 : i32, i32
  }
}

</mosaic_0001>

<llo_original>
// kernel: mpnn_net_forward.1
$region0: #{mpnn_net_forward.1}
  #allocation0 [shape = 'u32[]', space=smem, size = 0x4, offset = 0x4, fixed_abs, tag = 'smem constant byte address 0x4 - core index']
  #allocation1 [shape = 'u32[144,128]{1,0:T(1,128)}', space=vmem, size = 0x12000, scoped, tag = 'internal scratch']
  #allocation2 [shape = 'bf16[128,128]{1,0:T(16,128)(2,1)}', space=vmem, size = 0x8000, scoped, tag = 'scratch operand']
  #allocation3 [shape = 'f32[128,128]{1,0:T(8,128)}', space=vmem, size = 0x10000, scoped, tag = 'scratch operand']
  #allocation4 [shape = 'bf16[128,128]{1,0:T(16,128)(2,1)}', space=vmem, size = 0x8000, scoped, tag = 'scratch operand']
  %s0 = inlined_call_operand.vmem [shape: bf16[128,128], index: 0, kind: input, shape index: {}]
  %s1 = inlined_call_operand.vmem [shape: bf16[128,128], index: 1, kind: input, shape index: {}]
  %s2 = inlined_call_operand.vmem [shape: bf16[2,128,128], index: 2, kind: input, shape index: {}]
  %s3 = inlined_call_operand.vmem [shape: f32[2,1,128], index: 3, kind: input, shape index: {}]
  %s4 = inlined_call_operand.vmem [shape: f32[128,1], index: 4, kind: input, shape index: {}]
  %s5 = inlined_call_operand.vmem [shape: f32[128,128], index: 5, kind: output, shape index: {}]
  %s6 = sld [smem:[#allocation0]]
  $region77: #{mpnn_net_forward.1} parent=0
    _
  %s8 = ssub.s32 1, %s6
  %s9 = scalar_select 0, %s8, %s6
  loop: start=0, step=1, limit=4
  $region2: #{mpnn_net_forward.1} parent=0 // loop_pre_header
    _
  $region3: #{mpnn_net_forward.1} parent=0 // loop_header
    %s11 = sphi 0, %s15
    %p12 = scmp.ge.s32.totalorder %s11, 4
    %s18 = sphi 0, %s37
    %s19 = sphi 0, %s33
    %s20 = sphi 0, %s29
    %s21 = sphi 0, %s18
    %s22 = sphi 0, %s19
    %s23 = sphi 0, %s20
    %s24 = sphi 0, %s21
    %s25 = sphi 0, %s22
    %s26 = sphi 0, %s23
    %s42 = sphi 0, %s44
    %s45 = sphi 0, %s42
    %s46 = sphi 0, %s45
    %s62 = sphi 0, %s46
    %s72 = sphi 0, %s74
    %s75 = sphi 0, %s72
    %s76 = sphi 0, %s75
    %s92 = sphi 0, %s76
    %s98 = sphi 0, %s100
    %s101 = sphi 0, %s98
    %s102 = sphi 0, %s101
    %s118 = sphi 0, %s102
    %s124 = sphi 0, %s126
    %s127 = sphi 0, %s124
    %s128 = sphi 0, %s127
    %s144 = sphi 0, %s128
    %s150 = sphi 0, %s152
    %s153 = sphi 0, %s150
    %s154 = sphi 0, %s153
    %s170 = sphi 0, %s154
    %s184 = sphi 0, %s186
    %s187 = sphi 0, %s184
    %s188 = sphi 0, %s187
    %s204 = sphi 0, %s188
  $region4: #{mpnn_net_forward.1} parent=0 // loop_header_branch
    %14 = sbr.rel (%p12) target = $region8
  $region5: #{mpnn_net_forward.1} parent=0 // loop_body
    %s16 = ssub.s32 %s11, 1
    %s17 = ssub.s32 %s11, 2
    %s27 = sadd.s32 1, %s20
    %p28 = scmp.ge.s32.totalorder %s27, 1
    %s29 = scalar_select %p28, 0, %s27
    %s30 = sadd.s32 1, %s19
    %s31 = scalar_select %p28, %s30, %s19
    %p32 = scmp.ge.s32.totalorder %s31, 1
    %s33 = scalar_select %p32, 0, %s31
    %s34 = sadd.s32 1, %s18
    %s35 = scalar_select %p32, %s34, %s18
    %p36 = scmp.ge.s32.totalorder %s35, 2
    %s37 = scalar_select %p36, 0, %s35
    %s38 = ssub.s32 %s20, %s29
    %s39 = ssub.s32 %s19, %s33
    %s40 = sor.u32 %s38, %s39
    %p41 = scmp.eq.s32.totalorder %s40, 0
    %s43 = sadd.s32 %s42, 1
    %s44 = scalar_select %p41, %s42, %s43
    %p47 = pneg %p41
    %p48 = scmp.eq.s32.totalorder %s11, 1
    %p49 = por %p47, %p48
    %p50 = scmp.ne.s32.totalorder %s42, %s45
    %p51 = scmp.eq.s32.totalorder %s11, 0
    %p52 = por %p50, %p51
    %p53 = scmp.ne.s32.totalorder %s42, %s45
    %p54 = scmp.eq.s32.totalorder %s16, 1
    %p55 = por %p53, %p54
    %p56 = scmp.ne.s32.totalorder %s45, %s46
    %p57 = scmp.eq.s32.totalorder %s16, 0
    %p58 = por %p56, %p57
    %p59 = scmp.ne.s32.totalorder %s45, %s46
    %p60 = scmp.eq.s32.totalorder %s17, 1
    %p61 = por %p59, %p60
    %p63 = scmp.ne.s32.totalorder %s46, %s62
    %p64 = scmp.eq.s32.totalorder %s17, 0
    %p65 = por %p63, %p64
    %s66 = ssub.s32 1, %s18
    %s67 = smul.u32 %s19, %s66
    %s68 = ssub.s32 1, %s37
    %s69 = smul.u32 %s33, %s68
    %s70 = ssub.s32 %s67, %s69
    %p71 = scmp.eq.s32.totalorder %s70, 0
    %s73 = sadd.s32 %s72, 1
    %s74 = scalar_select %p71, %s72, %s73
    %p77 = pneg %p71
    %p78 = scmp.eq.s32.totalorder %s11, 1
    %p79 = por %p77, %p78
    %p80 = scmp.ne.s32.totalorder %s72, %s75
    %p81 = scmp.eq.s32.totalorder %s11, 0
    %p82 = por %p80, %p81
    %p83 = scmp.ne.s32.totalorder %s72, %s75
    %p84 = scmp.eq.s32.totalorder %s16, 1
    %p85 = por %p83, %p84
    %p86 = scmp.ne.s32.totalorder %s75, %s76
    %p87 = scmp.eq.s32.totalorder %s16, 0
    %p88 = por %p86, %p87
    %p89 = scmp.ne.s32.totalorder %s75, %s76
    %p90 = scmp.eq.s32.totalorder %s17, 1
    %p91 = por %p89, %p90
    %p93 = scmp.ne.s32.totalorder %s76, %s92
    %p94 = scmp.eq.s32.totalorder %s17, 0
    %p95 = por %p93, %p94
    %s96 = ssub.s32 %s18, %s37
    %p97 = scmp.eq.s32.totalorder %s96, 0
    %s99 = sadd.s32 %s98, 1
    %s100 = scalar_select %p97, %s98, %s99
    %p103 = pneg %p97
    %p104 = scmp.eq.s32.totalorder %s11, 1
    %p105 = por %p103, %p104
    %p106 = scmp.ne.s32.totalorder %s98, %s101
    %p107 = scmp.eq.s32.totalorder %s11, 0
    %p108 = por %p106, %p107
    %p109 = scmp.ne.s32.totalorder %s98, %s101
    %p110 = scmp.eq.s32.totalorder %s16, 1
    %p111 = por %p109, %p110
    %p112 = scmp.ne.s32.totalorder %s101, %s102
    %p113 = scmp.eq.s32.totalorder %s16, 0
    %p114 = por %p112, %p113
    %p115 = scmp.ne.s32.totalorder %s101, %s102
    %p116 = scmp.eq.s32.totalorder %s17, 1
    %p117 = por %p115, %p116
    %p119 = scmp.ne.s32.totalorder %s102, %s118
    %p120 = scmp.eq.s32.totalorder %s17, 0
    %p121 = por %p119, %p120
    %s122 = ssub.s32 %s18, %s37
    %p123 = scmp.eq.s32.totalorder %s122, 0
    %s125 = sadd.s32 %s124, 1
    %s126 = scalar_select %p123, %s124, %s125
    %p129 = pneg %p123
    %p130 = scmp.eq.s32.totalorder %s11, 1
    %p131 = por %p129, %p130
    %p132 = scmp.ne.s32.totalorder %s124, %s127
    %p133 = scmp.eq.s32.totalorder %s11, 0
    %p134 = por %p132, %p133
    %p135 = scmp.ne.s32.totalorder %s124, %s127
    %p136 = scmp.eq.s32.totalorder %s16, 1
    %p137 = por %p135, %p136
    %p138 = scmp.ne.s32.totalorder %s127, %s128
    %p139 = scmp.eq.s32.totalorder %s16, 0
    %p140 = por %p138, %p139
    %p141 = scmp.ne.s32.totalorder %s127, %s128
    %p142 = scmp.eq.s32.totalorder %s17, 1
    %p143 = por %p141, %p142
    %p145 = scmp.ne.s32.totalorder %s128, %s144
    %p146 = scmp.eq.s32.totalorder %s17, 0
    %p147 = por %p145, %p146
    %s148 = ssub.s32 %s20, %s29
    %p149 = scmp.eq.s32.totalorder %s148, 0
    %s151 = sadd.s32 %s150, 1
    %s152 = scalar_select %p149, %s150, %s151
    %p155 = pneg %p149
    %p156 = scmp.eq.s32.totalorder %s11, 1
    %p157 = por %p155, %p156
    %p158 = scmp.ne.s32.totalorder %s150, %s153
    %p159 = scmp.eq.s32.totalorder %s11, 0
    %p160 = por %p158, %p159
    %p161 = scmp.ne.s32.totalorder %s150, %s153
    %p162 = scmp.eq.s32.totalorder %s16, 1
    %p163 = por %p161, %p162
    %p164 = scmp.ne.s32.totalorder %s153, %s154
    %p165 = scmp.eq.s32.totalorder %s16, 0
    %p166 = por %p164, %p165
    %p167 = scmp.ne.s32.totalorder %s153, %s154
    %p168 = scmp.eq.s32.totalorder %s17, 1
    %p169 = por %p167, %p168
    %p171 = scmp.ne.s32.totalorder %s154, %s170
    %p172 = scmp.eq.s32.totalorder %s17, 0
    %p173 = por %p171, %p172
    %s174 = smul.u32 %s20, %s18
    %p175 = scmp.eq.s32.totalorder %s19, 0
    %s176 = scalar_select %p175, 1, 0
    %s177 = smul.u32 %s174, %s176
    %s178 = smul.u32 %s29, %s37
    %p179 = scmp.eq.s32.totalorder %s33, 0
    %s180 = scalar_select %p179, 1, 0
    %s181 = smul.u32 %s178, %s180
    %s182 = ssub.s32 %s177, %s181
    %p183 = scmp.eq.s32.totalorder %s182, 0
    %s185 = sadd.s32 %s184, 1
    %s186 = scalar_select %p183, %s184, %s185
    %p189 = pneg %p183
    %p190 = scmp.eq.s32.totalorder %s11, 1
    %p191 = por %p189, %p190
    %p192 = scmp.ne.s32.totalorder %s184, %s187
    %p193 = scmp.eq.s32.totalorder %s11, 0
    %p194 = por %p192, %p193
    %p195 = scmp.ne.s32.totalorder %s184, %s187
    %p196 = scmp.eq.s32.totalorder %s16, 1
    %p197 = por %p195, %p196
    %p198 = scmp.ne.s32.totalorder %s187, %s188
    %p199 = scmp.eq.s32.totalorder %s16, 0
    %p200 = por %p198, %p199
    %p201 = scmp.ne.s32.totalorder %s187, %s188
    %p202 = scmp.eq.s32.totalorder %s17, 1
    %p203 = por %p201, %p202
    %p205 = scmp.ne.s32.totalorder %s188, %s204
    %p206 = scmp.eq.s32.totalorder %s17, 0
    %p207 = por %p205, %p206
    %p208 = scmp.le.s32.totalorder 1, %s11
    %p209 = scmp.lt.s32.totalorder %s11, 3
    %p210 = pnand %p208, %p209
    %p211 = pneg %p210
    // Predicated region
    $region9: #{mpnn_net_forward.1} parent=5 // pred_check
      _
    $region10: #{mpnn_net_forward.1} parent=5 // pred_check_branch
      %213 = sbr.rel (%p210) target = $region12
    $region11: #{mpnn_net_forward.1} parent=5 // pred_region
      %s214 = ssub.s32 %s11, 1
      // Predicated region
      $region13: #{mpnn_net_forward.1} parent=11 // pred_check
        %p215 = pneg %p58
      $region14: #{mpnn_net_forward.1} parent=11 // pred_check_branch
        %217 = sbr.rel (%p215) target = $region16
      $region15: #{mpnn_net_forward.1} parent=11 // pred_region
        %s218 = smul.u32 16, %s23
        %p219 = scmp.lt.s32.totalorder %s218, 15
        %s220 = scalar_select %p219, %s218, 15
        %p221 = scmp.lt.s32.totalorder %s22, 0
        %s222 = scalar_select %p221, %s22, 0
        %s223 = sadd.s32 %s222, %s220
        %s224 = smul.addr %s223, 4
        %s225 = scalar_lea.vmem %s0, %s224
        %s226 = smul.u32 16, %s23
      $region16: #{mpnn_net_forward.1} parent=11 // pred_fallthru
        _
      // Predicated region
      $region17: #{mpnn_net_forward.1} parent=11 // pred_check
        %p227 = pneg %p166
      $region18: #{mpnn_net_forward.1} parent=11 // pred_check_branch
        %229 = sbr.rel (%p227) target = $region20
      $region19: #{mpnn_net_forward.1} parent=11 // pred_region
        %s230 = smul.u32 16, %s23
        %p231 = scmp.lt.s32.totalorder %s230, 15
        %s232 = scalar_select %p231, %s230, 15
        %s233 = smul.addr %s232, 8
        %s234 = scalar_lea.vmem %s4, %s233
        %s235 = smul.u32 16, %s23
      $region20: #{mpnn_net_forward.1} parent=11 // pred_fallthru
        _
    $region12: #{mpnn_net_forward.1} parent=5 // pred_fallthru
      _
    %p236 = scmp.lt.s32.totalorder %s11, 2
    // Predicated region
    $region21: #{mpnn_net_forward.1} parent=5 // pred_check
      %p237 = pneg %p236
    $region22: #{mpnn_net_forward.1} parent=5 // pred_check_branch
      %239 = sbr.rel (%p237) target = $region24
    $region23: #{mpnn_net_forward.1} parent=5 // pred_region
      // Predicated region
      $region25: #{mpnn_net_forward.1} parent=23 // pred_check
        %p240 = pneg %p82
      $region26: #{mpnn_net_forward.1} parent=23 // pred_check_branch
        %242 = sbr.rel (%p240) target = $region28
      $region27: #{mpnn_net_forward.1} parent=23 // pred_region
        %s243 = ssub.s32 1, %s18
        %s244 = smul.u32 %s19, %s243
        %s245 = smul.u32 16, %s244
        %p246 = scmp.lt.s32.totalorder %s245, 15
        %s247 = scalar_select %p246, %s245, 15
        %s248 = smul.addr %s247, 4
        %s249 = scalar_lea.vmem %s1, %s248
        %s250 = ssub.s32 1, %s18
        %s251 = smul.u32 %s19, %s250
        %s252 = smul.u32 16, %s251
      $region28: #{mpnn_net_forward.1} parent=23 // pred_fallthru
        _
      // Predicated region
      $region29: #{mpnn_net_forward.1} parent=23 // pred_check
        %p253 = pneg %p108
      $region30: #{mpnn_net_forward.1} parent=23 // pred_check_branch
        %255 = sbr.rel (%p253) target = $region32
      $region31: #{mpnn_net_forward.1} parent=23 // pred_region
        %p256 = scmp.lt.s32.totalorder %s18, 1
        %s257 = scalar_select %p256, %s18, 1
        %s258 = smul.addr %s257, 16
        %s259 = smul.addr %s258, 4
        %s260 = scalar_lea.vmem %s2, %s259
      $region32: #{mpnn_net_forward.1} parent=23 // pred_fallthru
        _
      // Predicated region
      $region33: #{mpnn_net_forward.1} parent=23 // pred_check
        %p261 = pneg %p134
      $region34: #{mpnn_net_forward.1} parent=23 // pred_check_branch
        %263 = sbr.rel (%p261) target = $region36
      $region35: #{mpnn_net_forward.1} parent=23 // pred_region
        %p264 = scmp.lt.s32.totalorder %s18, 1
        %s265 = scalar_select %p264, %s18, 1
        %s266 = scalar_lea.vmem %s3, %s265
      $region36: #{mpnn_net_forward.1} parent=23 // pred_fallthru
        _
    $region24: #{mpnn_net_forward.1} parent=5 // pred_fallthru
      _
    %p267 = scmp.le.s32.totalorder 1, %s11
    %p268 = scmp.lt.s32.totalorder %s11, 3
    %p269 = pnand %p267, %p268
    %p270 = pneg %p269
    // Predicated region
    $region37: #{mpnn_net_forward.1} parent=5 // pred_check
      _
    $region38: #{mpnn_net_forward.1} parent=5 // pred_check_branch
      %272 = sbr.rel (%p269) target = $region40
    $region39: #{mpnn_net_forward.1} parent=5 // pred_region
      %s273 = ssub.s32 %s11, 1
      %s274 = smul.u32 16, %s23
      %p275 = scmp.lt.s32.totalorder %s274, 15
      %s276 = scalar_select %p275, %s274, 15
      %p277 = scmp.lt.s32.totalorder %s22, 0
      %s278 = scalar_select %p277, %s22, 0
      %s279 = sadd.s32 %s278, %s276
      %s280 = smul.addr %s279, 4
      %s281 = scalar_lea.vmem %s0, %s280
      %p282 = pneg %p58
      %p283 = pneg %p55
      %s284 = ssub.s32 1, %s21
      %s285 = smul.u32 %s22, %s284
      %s286 = smul.u32 16, %s285
      %p287 = scmp.lt.s32.totalorder %s286, 15
      %s288 = scalar_select %p287, %s286, 15
      %s289 = smul.addr %s288, 4
      %s290 = scalar_lea.vmem %s1, %s289
      %p291 = pneg %p88
      %p292 = pneg %p85
      %p293 = scmp.lt.s32.totalorder %s21, 1
      %s294 = scalar_select %p293, %s21, 1
      %s295 = smul.addr %s294, 16
      %s296 = smul.addr %s295, 4
      %s297 = scalar_lea.vmem %s2, %s296
      %p298 = pneg %p114
      %p299 = pneg %p111
      %p300 = scmp.lt.s32.totalorder %s21, 1
      %s301 = scalar_select %p300, %s21, 1
      %s302 = scalar_lea.vmem %s3, %s301
      %p303 = pneg %p140
      %p304 = pneg %p137
      %s305 = smul.u32 16, %s23
      %p306 = scmp.lt.s32.totalorder %s305, 15
      %s307 = scalar_select %p306, %s305, 15
      %s308 = smul.addr %s307, 8
      %s309 = scalar_lea.vmem %s4, %s308
      %p310 = pneg %p166
      %p311 = pneg %p163
      %p312 = pneg %p200
      %p313 = pneg %p197
      %s314 = smul.u32 %s23, %s21
      %p315 = scmp.eq.s32.totalorder %s22, 0
      %s316 = scalar_select %p315, 1, 0
      %s317 = smul.u32 %s314, %s316
      %s318 = smul.u32 16, %s317
      %p319 = scmp.lt.s32.totalorder %s318, 15
      %s320 = scalar_select %p319, %s318, 15
      %s321 = smul.addr %s320, 8
      %s322 = scalar_lea.vmem %s5, %s321
      %s323 = smul.u32 16, %s23
      %p324 = scmp.lt.s32.totalorder %s323, 15
      %s325 = scalar_select %p324, %s323, 15
      %p326 = scmp.lt.s32.totalorder %s22, 0
      %s327 = scalar_select %p326, %s22, 0
      %s328 = sadd.s32 %s327, %s325
      %s329 = smul.addr %s328, 4
      %s330 = scalar_lea.vmem %s0, %s329
      %s331 = smul.u32 16, %s23
      %s332 = ssub.s32 1, %s21
      %s333 = smul.u32 %s22, %s332
      %s334 = smul.u32 16, %s333
      %p335 = scmp.lt.s32.totalorder %s334, 15
      %s336 = scalar_select %p335, %s334, 15
      %s337 = smul.addr %s336, 4
      %s338 = scalar_lea.vmem %s1, %s337
      %s339 = ssub.s32 1, %s21
      %s340 = smul.u32 %s22, %s339
      %s341 = smul.u32 16, %s340
      %p342 = scmp.lt.s32.totalorder %s21, 1
      %s343 = scalar_select %p342, %s21, 1
      %s344 = smul.addr %s343, 16
      %s345 = smul.addr %s344, 4
      %s346 = scalar_lea.vmem %s2, %s345
      %p347 = scmp.lt.s32.totalorder %s21, 1
      %s348 = scalar_select %p347, %s21, 1
      %s349 = scalar_lea.vmem %s3, %s348
      %s350 = smul.u32 16, %s23
      %p351 = scmp.lt.s32.totalorder %s350, 15
      %s352 = scalar_select %p351, %s350, 15
      %s353 = smul.addr %s352, 8
      %s354 = scalar_lea.vmem %s4, %s353
      %s355 = smul.u32 16, %s23
      %s356 = smul.u32 %s23, %s21
      %p357 = scmp.eq.s32.totalorder %s22, 0
      %s358 = scalar_select %p357, 1, 0
      %s359 = smul.u32 %s356, %s358
      %s360 = smul.u32 16, %s359
      %p361 = scmp.lt.s32.totalorder %s360, 15
      %s362 = scalar_select %p361, %s360, 15
      %s363 = smul.addr %s362, 8
      %s364 = scalar_lea.vmem %s5, %s363
      %s365 = smul.u32 %s23, %s21
      %p366 = scmp.eq.s32.totalorder %s22, 0
      %s367 = scalar_select %p366, 1, 0
      %s368 = smul.u32 %s365, %s367
      %s369 = smul.u32 16, %s368
      %s371 = smul.u32 %s23, 128
      %p372 = scmp.eq.s32.totalorder %s23, 0
      %p373 = scmp.eq.s32.totalorder %s21, 0
      %p374 = pnand %p372, %p373
      %p375 = pneg %p374
      // Predicated region
      $region41: #{mpnn_net_forward.1} parent=39 // pred_check
        _
      $region42: #{mpnn_net_forward.1} parent=39 // pred_check_branch
        %377 = sbr.rel (%p374) target = $region44
      $region43: #{mpnn_net_forward.1} parent=39 // pred_region
        %v378 = vld [vmem:[%s338] sm:$0xf]
        %v379 = vld [vmem:[%s338 + $0x4] sm:$0xf]
        %v380 = vld [vmem:[%s338 + $0x8] sm:$0xf]
        %v381 = vld [vmem:[%s338 + $0xc] sm:$0xf]
        %v382 = vld [vmem:[%s338 + $0x10] sm:$0xf]
        %v383 = vld [vmem:[%s338 + $0x14] sm:$0xf]
        %v384 = vld [vmem:[%s338 + $0x18] sm:$0xf]
        %v385 = vld [vmem:[%s338 + $0x1c] sm:$0xf]
        %v386 = vld [vmem:[%s338 + $0x20] sm:$0xf]
        %v387 = vld [vmem:[%s338 + $0x24] sm:$0xf]
        %v388 = vld [vmem:[%s338 + $0x28] sm:$0xf]
        %v389 = vld [vmem:[%s338 + $0x2c] sm:$0xf]
        %v390 = vld [vmem:[%s338 + $0x30] sm:$0xf]
        %v391 = vld [vmem:[%s338 + $0x34] sm:$0xf]
        %v392 = vld [vmem:[%s338 + $0x38] sm:$0xf]
        %v393 = vld [vmem:[%s338 + $0x3c] sm:$0xf]
        %v394 = vld [vmem:[%s346] sm:$0xf]
        %v395 = vld [vmem:[%s346 + $0x4] sm:$0xf]
        %v396 = vld [vmem:[%s346 + $0x8] sm:$0xf]
        %v397 = vld [vmem:[%s346 + $0xc] sm:$0xf]
        %v398 = vld [vmem:[%s346 + $0x10] sm:$0xf]
        %v399 = vld [vmem:[%s346 + $0x14] sm:$0xf]
        %v400 = vld [vmem:[%s346 + $0x18] sm:$0xf]
        %v401 = vld [vmem:[%s346 + $0x1c] sm:$0xf]
        %v402 = vld [vmem:[%s346 + $0x20] sm:$0xf]
        %v403 = vld [vmem:[%s346 + $0x24] sm:$0xf]
        %v404 = vld [vmem:[%s346 + $0x28] sm:$0xf]
        %v405 = vld [vmem:[%s346 + $0x2c] sm:$0xf]
        %v406 = vld [vmem:[%s346 + $0x30] sm:$0xf]
        %v407 = vld [vmem:[%s346 + $0x34] sm:$0xf]
        %v408 = vld [vmem:[%s346 + $0x38] sm:$0xf]
        %v409 = vld [vmem:[%s346 + $0x3c] sm:$0xf]
        %v426 = vunpack.c.l.b16 %v378
        %v427 = vunpack.c.l.b16 %v379
        %v428 = vunpack.c.l.b16 %v380
        %v429 = vunpack.c.l.b16 %v381
        %v430 = vunpack.c.l.b16 %v382
        %v431 = vunpack.c.l.b16 %v383
        %v432 = vunpack.c.l.b16 %v384
        %v433 = vunpack.c.l.b16 %v385
        %v434 = vunpack.c.l.b16 %v386
        %v435 = vunpack.c.l.b16 %v387
        %v436 = vunpack.c.l.b16 %v388
        %v437 = vunpack.c.l.b16 %v389
        %v438 = vunpack.c.l.b16 %v390
        %v439 = vunpack.c.l.b16 %v391
        %v440 = vunpack.c.l.b16 %v392
        %v441 = vunpack.c.l.b16 %v393
        %v442 = vpack.c.b16 %v427, %v426
        %v443 = vpack.c.b16 %v429, %v428
        %v444 = vpack.c.b16 %v431, %v430
        %v445 = vpack.c.b16 %v433, %v432
        %v446 = vpack.c.b16 %v435, %v434
        %v447 = vpack.c.b16 %v437, %v436
        %v448 = vpack.c.b16 %v439, %v438
        %v449 = vpack.c.b16 %v441, %v440
        %v474 = vunpack.c.l.b16 %v394
        %v475 = vunpack.c.l.b16 %v395
        %v476 = vunpack.c.l.b16 %v396
        %v477 = vunpack.c.l.b16 %v397
        %v478 = vunpack.c.l.b16 %v398
        %v479 = vunpack.c.l.b16 %v399
        %v480 = vunpack.c.l.b16 %v400
        %v481 = vunpack.c.l.b16 %v401
        %v482 = vunpack.c.l.b16 %v402
        %v483 = vunpack.c.l.b16 %v403
        %v484 = vunpack.c.l.b16 %v404
        %v485 = vunpack.c.l.b16 %v405
        %v486 = vunpack.c.l.b16 %v406
        %v487 = vunpack.c.l.b16 %v407
        %v488 = vunpack.c.l.b16 %v408
        %v489 = vunpack.c.l.b16 %v409
        %v490 = vpack.c.b16 %v475, %v474
        %v491 = vpack.c.b16 %v477, %v476
        %v492 = vpack.c.b16 %v479, %v478
        %v493 = vpack.c.b16 %v481, %v480
        %v494 = vpack.c.b16 %v483, %v482
        %v495 = vpack.c.b16 %v485, %v484
        %v496 = vpack.c.b16 %v487, %v486
        %v497 = vpack.c.b16 %v489, %v488
        %506 = vmatprep.subr.bf16.mxu0 0
        %507 = vmatpush1.bf16.msra.mxu0 %v490
        %508 = vmatprep.subr.bf16.mxu0 0
        %509 = vmatpush1.bf16.msra.mxu0 %v491
        %510 = vmatprep.subr.bf16.mxu0 0
        %511 = vmatpush1.bf16.msra.mxu0 %v492
        %512 = vmatprep.subr.bf16.mxu0 0
        %513 = vmatpush1.bf16.msra.mxu0 %v493
        %514 = vmatprep.subr.bf16.mxu0 0
        %515 = vmatpush1.bf16.msra.mxu0 %v494
        %516 = vmatprep.subr.bf16.mxu0 0
        %517 = vmatpush1.bf16.msra.mxu0 %v495
        %518 = vmatprep.subr.bf16.mxu0 0
        %519 = vmatpush1.bf16.msra.mxu0 %v496
        %520 = vmatprep.subr.bf16.mxu0 0
        %521 = vmatpush1.bf16.msra.mxu0 %v497
        %522 = vmatprep.subr.bf16.mxu0 0
        %523 = vmatpush1.bf16.msra.mxu0 0
        %524 = vmatprep.subr.bf16.mxu0 0
        %525 = vmatpush1.bf16.msra.mxu0 0
        %526 = vmatprep.subr.bf16.mxu0 0
        %527 = vmatpush1.bf16.msra.mxu0 0
        %528 = vmatprep.subr.bf16.mxu0 0
        %529 = vmatpush1.bf16.msra.mxu0 0
        %530 = vmatprep.subr.bf16.mxu0 0
        %531 = vmatpush1.bf16.msra.mxu0 0
        %532 = vmatprep.subr.bf16.mxu0 0
        %533 = vmatpush1.bf16.msra.mxu0 0
        %534 = vmatprep.subr.bf16.mxu0 0
        %535 = vmatpush1.bf16.msra.mxu0 0
        %536 = vmatprep.subr.bf16.mxu0 0
        %537 = vmatpush1.bf16.msra.mxu0 0
        %538 = vmatprep.mubr.bf16.mxu0 0
        %539 = vmatmul.mubr.bf16.gmra.mrb[0].mxu0 %v442
        %v540 = vpop.f32.mrb[0].mxu0
        %v541 = vadd.f32 0.0, %v540
        %v542 = vpop.f32.mrb[0].mxu0
        %v543 = vpop.f32.mrb[0].mxu0
        %v544 = vadd.f32 0.0, %v543
        %v545 = vpop.f32.mrb[0].mxu0
        %546 = vmatprep.mubr.bf16.mxu0 0
        %547 = vmatmul.mubr.bf16.gmra.mrb[0].mxu0 %v443
        %v548 = vpop.f32.mrb[0].mxu0
        %v549 = vadd.f32 0.0, %v548
        %v550 = vpop.f32.mrb[0].mxu0
        %v551 = vpop.f32.mrb[0].mxu0
        %v552 = vadd.f32 0.0, %v551
        %v553 = vpop.f32.mrb[0].mxu0
        %554 = vmatprep.mubr.bf16.mxu0 0
        %555 = vmatmul.mubr.bf16.gmra.mrb[0].mxu0 %v444
        %v556 = vpop.f32.mrb[0].mxu0
        %v557 = vadd.f32 0.0, %v556
        %v558 = vpop.f32.mrb[0].mxu0
        %v559 = vpop.f32.mrb[0].mxu0
        %v560 = vadd.f32 0.0, %v559
        %v561 = vpop.f32.mrb[0].mxu0
        %562 = vmatprep.mubr.bf16.mxu0 0
        %563 = vmatmul.mubr.bf16.gmra.mrb[0].mxu0 %v445
        %v564 = vpop.f32.mrb[0].mxu0
        %v565 = vadd.f32 0.0, %v564
        %v566 = vpop.f32.mrb[0].mxu0
        %v567 = vpop.f32.mrb[0].mxu0
        %v568 = vadd.f32 0.0, %v567
        %v569 = vpop.f32.mrb[0].mxu0
        %570 = vmatprep.mubr.bf16.mxu0 0
        %571 = vmatmul.mubr.bf16.gmra.mrb[0].mxu0 %v446
        %v572 = vpop.f32.mrb[0].mxu0
        %v573 = vadd.f32 0.0, %v572
        %v574 = vpop.f32.mrb[0].mxu0
        %v575 = vpop.f32.mrb[0].mxu0
        %v576 = vadd.f32 0.0, %v575
        %v577 = vpop.f32.mrb[0].mxu0
        %578 = vmatprep.mubr.bf16.mxu0 0
        %579 = vmatmul.mubr.bf16.gmra.mrb[0].mxu0 %v447
        %v580 = vpop.f32.mrb[0].mxu0
        %v581 = vadd.f32 0.0, %v580
        %v582 = vpop.f32.mrb[0].mxu0
        %v583 = vpop.f32.mrb[0].mxu0
        %v584 = vadd.f32 0.0, %v583
        %v585 = vpop.f32.mrb[0].mxu0
        %586 = vmatprep.mubr.bf16.mxu0 0
        %587 = vmatmul.mubr.bf16.gmra.mrb[0].mxu0 %v448
        %v588 = vpop.f32.mrb[0].mxu0
        %v589 = vadd.f32 0.0, %v588
        %v590 = vpop.f32.mrb[0].mxu0
        %v591 = vpop.f32.mrb[0].mxu0
        %v592 = vadd.f32 0.0, %v591
        %v593 = vpop.f32.mrb[0].mxu0
        %594 = vmatprep.mubr.bf16.mxu0 0
        %595 = vmatmul.mubr.bf16.gmra.mrb[0].mxu0 %v449
        %v596 = vpop.f32.mrb[0].mxu0
        %v597 = vadd.f32 0.0, %v596
        %v598 = vpop.f32.mrb[0].mxu0
        %v599 = vpop.f32.mrb[0].mxu0
        %v600 = vadd.f32 0.0, %v599
        %v601 = vpop.f32.mrb[0].mxu0
        %602 = vdwg.mxu0
        %v603 = vpack.c.bf16 %v544, %v541
        %v604 = vpack.c.bf16 %v552, %v549
        %v605 = vpack.c.bf16 %v560, %v557
        %v606 = vpack.c.bf16 %v568, %v565
        %v607 = vpack.c.bf16 %v576, %v573
        %v608 = vpack.c.bf16 %v584, %v581
        %v609 = vpack.c.bf16 %v592, %v589
        %v610 = vpack.c.bf16 %v600, %v597
        %611 = vst [vmem:[#allocation2] sm:$0xff] %v603
        %612 = vst [vmem:[#allocation2 + $0x8] sm:$0xff] %v604
        %613 = vst [vmem:[#allocation2 + $0x10] sm:$0xff] %v605
        %614 = vst [vmem:[#allocation2 + $0x18] sm:$0xff] %v606
        %615 = vst [vmem:[#allocation2 + $0x20] sm:$0xff] %v607
        %616 = vst [vmem:[#allocation2 + $0x28] sm:$0xff] %v608
        %617 = vst [vmem:[#allocation2 + $0x30] sm:$0xff] %v609
        %618 = vst [vmem:[#allocation2 + $0x38] sm:$0xff] %v610
      $region44: #{mpnn_net_forward.1} parent=39 // pred_fallthru
        _
      %p619 = scmp.eq.s32.totalorder %s21, 1
      %p620 = pnand %p372, %p619
      %p621 = pneg %p620
      // Predicated region
      $region45: #{mpnn_net_forward.1} parent=39 // pred_check
        _
      $region46: #{mpnn_net_forward.1} parent=39 // pred_check_branch
        %623 = sbr.rel (%p620) target = $region48
      $region47: #{mpnn_net_forward.1} parent=39 // pred_region
        %s624 = smul.u32 %s22, 128
        %s625 = sshra.s32 %s624, 4
        %s626 = sand.u32 %s624, 15
        %s627 = smul.addr %s625, 8
        %s628 = scalar_lea.vmem [#allocation4], %s627
        %v629 = vld [vmem:[%s628] sm:$0xff]
        %v630 = vld [vmem:[%s628 + $0x8] sm:$0xff]
        %v631 = vld [vmem:[%s628 + $0x10] sm:$0xff]
        %v632 = vld [vmem:[%s628 + $0x18] sm:$0xff]
        %v633 = vld [vmem:[%s628 + $0x20] sm:$0xff]
        %v634 = vld [vmem:[%s628 + $0x28] sm:$0xff]
        %v635 = vld [vmem:[%s628 + $0x30] sm:$0xff]
        %v636 = vld [vmem:[%s628 + $0x38] sm:$0xff]
        %v637 = vld [vmem:[%s346] sm:$0xf]
        %v638 = vld [vmem:[%s346 + $0x4] sm:$0xf]
        %v639 = vld [vmem:[%s346 + $0x8] sm:$0xf]
        %v640 = vld [vmem:[%s346 + $0xc] sm:$0xf]
        %v641 = vld [vmem:[%s346 + $0x10] sm:$0xf]
        %v642 = vld [vmem:[%s346 + $0x14] sm:$0xf]
        %v643 = vld [vmem:[%s346 + $0x18] sm:$0xf]
        %v644 = vld [vmem:[%s346 + $0x1c] sm:$0xf]
        %v645 = vld [vmem:[%s346 + $0x20] sm:$0xf]
        %v646 = vld [vmem:[%s346 + $0x24] sm:$0xf]
        %v647 = vld [vmem:[%s346 + $0x28] sm:$0xf]
        %v648 = vld [vmem:[%s346 + $0x2c] sm:$0xf]
        %v649 = vld [vmem:[%s346 + $0x30] sm:$0xf]
        %v650 = vld [vmem:[%s346 + $0x34] sm:$0xf]
        %v651 = vld [vmem:[%s346 + $0x38] sm:$0xf]
        %v652 = vld [vmem:[%s346 + $0x3c] sm:$0xf]
        %v669 = vunpack.c.l.b16 %v637
        %v670 = vunpack.c.l.b16 %v638
        %v671 = vunpack.c.l.b16 %v639
        %v672 = vunpack.c.l.b16 %v640
        %v673 = vunpack.c.l.b16 %v641
        %v674 = vunpack.c.l.b16 %v642
        %v675 = vunpack.c.l.b16 %v643
        %v676 = vunpack.c.l.b16 %v644
        %v677 = vunpack.c.l.b16 %v645
        %v678 = vunpack.c.l.b16 %v646
        %v679 = vunpack.c.l.b16 %v647
        %v680 = vunpack.c.l.b16 %v648
        %v681 = vunpack.c.l.b16 %v649
        %v682 = vunpack.c.l.b16 %v650
        %v683 = vunpack.c.l.b16 %v651
        %v684 = vunpack.c.l.b16 %v652
        %v685 = vpack.c.b16 %v670, %v669
        %v686 = vpack.c.b16 %v672, %v671
        %v687 = vpack.c.b16 %v674, %v673
        %v688 = vpack.c.b16 %v676, %v675
        %v689 = vpack.c.b16 %v678, %v677
        %v690 = vpack.c.b16 %v680, %v679
        %v691 = vpack.c.b16 %v682, %v681
        %v692 = vpack.c.b16 %v684, %v683
        %701 = vmatprep.subr.bf16.mxu0 0
        %702 = vmatpush1.bf16.msra.mxu0 %v685
        %703 = vmatprep.subr.bf16.mxu0 0
        %704 = vmatpush1.bf16.msra.mxu0 %v686
        %705 = vmatprep.subr.bf16.mxu0 0
        %706 = vmatpush1.bf16.msra.mxu0 %v687
        %707 = vmatprep.subr.bf16.mxu0 0
        %708 = vmatpush1.bf16.msra.mxu0 %v688
        %709 = vmatprep.subr.bf16.mxu0 0
        %710 = vmatpush1.bf16.msra.mxu0 %v689
        %711 = vmatprep.subr.bf16.mxu0 0
        %712 = vmatpush1.bf16.msra.mxu0 %v690
        %713 = vmatprep.subr.bf16.mxu0 0
        %714 = vmatpush1.bf16.msra.mxu0 %v691
        %715 = vmatprep.subr.bf16.mxu0 0
        %716 = vmatpush1.bf16.msra.mxu0 %v692
        %717 = vmatprep.subr.bf16.mxu0 0
        %718 = vmatpush1.bf16.msra.mxu0 0
        %719 = vmatprep.subr.bf16.mxu0 0
        %720 = vmatpush1.bf16.msra.mxu0 0
        %721 = vmatprep.subr.bf16.mxu0 0
        %722 = vmatpush1.bf16.msra.mxu0 0
        %723 = vmatprep.subr.bf16.mxu0 0
        %724 = vmatpush1.bf16.msra.mxu0 0
        %725 = vmatprep.subr.bf16.mxu0 0
        %726 = vmatpush1.bf16.msra.mxu0 0
        %727 = vmatprep.subr.bf16.mxu0 0
        %728 = vmatpush1.bf16.msra.mxu0 0
        %729 = vmatprep.subr.bf16.mxu0 0
        %730 = vmatpush1.bf16.msra.mxu0 0
        %731 = vmatprep.subr.bf16.mxu0 0
        %732 = vmatpush1.bf16.msra.mxu0 0
        %733 = vmatprep.mubr.bf16.mxu0 0
        %734 = vmatmul.mubr.bf16.gmra.mrb[0].mxu0 %v629
        %v735 = vpop.f32.mrb[0].mxu0
        %v736 = vadd.f32 0.0, %v735
        %v737 = vpop.f32.mrb[0].mxu0
        %v738 = vpop.f32.mrb[0].mxu0
        %v739 = vadd.f32 0.0, %v738
        %v740 = vpop.f32.mrb[0].mxu0
        %741 = vmatprep.mubr.bf16.mxu0 0
        %742 = vmatmul.mubr.bf16.gmra.mrb[0].mxu0 %v630
        %v743 = vpop.f32.mrb[0].mxu0
        %v744 = vadd.f32 0.0, %v743
        %v745 = vpop.f32.mrb[0].mxu0
        %v746 = vpop.f32.mrb[0].mxu0
        %v747 = vadd.f32 0.0, %v746
        %v748 = vpop.f32.mrb[0].mxu0
        %749 = vmatprep.mubr.bf16.mxu0 0
        %750 = vmatmul.mubr.bf16.gmra.mrb[0].mxu0 %v631
        %v751 = vpop.f32.mrb[0].mxu0
        %v752 = vadd.f32 0.0, %v751
        %v753 = vpop.f32.mrb[0].mxu0
        %v754 = vpop.f32.mrb[0].mxu0
        %v755 = vadd.f32 0.0, %v754
        %v756 = vpop.f32.mrb[0].mxu0
        %757 = vmatprep.mubr.bf16.mxu0 0
        %758 = vmatmul.mubr.bf16.gmra.mrb[0].mxu0 %v632
        %v759 = vpop.f32.mrb[0].mxu0
        %v760 = vadd.f32 0.0, %v759
        %v761 = vpop.f32.mrb[0].mxu0
        %v762 = vpop.f32.mrb[0].mxu0
        %v763 = vadd.f32 0.0, %v762
        %v764 = vpop.f32.mrb[0].mxu0
        %765 = vmatprep.mubr.bf16.mxu0 0
        %766 = vmatmul.mubr.bf16.gmra.mrb[0].mxu0 %v633
        %v767 = vpop.f32.mrb[0].mxu0
        %v768 = vadd.f32 0.0, %v767
        %v769 = vpop.f32.mrb[0].mxu0
        %v770 = vpop.f32.mrb[0].mxu0
        %v771 = vadd.f32 0.0, %v770
        %v772 = vpop.f32.mrb[0].mxu0
        %773 = vmatprep.mubr.bf16.mxu0 0
        %774 = vmatmul.mubr.bf16.gmra.mrb[0].mxu0 %v634
        %v775 = vpop.f32.mrb[0].mxu0
        %v776 = vadd.f32 0.0, %v775
        %v777 = vpop.f32.mrb[0].mxu0
        %v778 = vpop.f32.mrb[0].mxu0
        %v779 = vadd.f32 0.0, %v778
        %v780 = vpop.f32.mrb[0].mxu0
        %781 = vmatprep.mubr.bf16.mxu0 0
        %782 = vmatmul.mubr.bf16.gmra.mrb[0].mxu0 %v635
        %v783 = vpop.f32.mrb[0].mxu0
        %v784 = vadd.f32 0.0, %v783
        %v785 = vpop.f32.mrb[0].mxu0
        %v786 = vpop.f32.mrb[0].mxu0
        %v787 = vadd.f32 0.0, %v786
        %v788 = vpop.f32.mrb[0].mxu0
        %789 = vmatprep.mubr.bf16.mxu0 0
        %790 = vmatmul.mubr.bf16.gmra.mrb[0].mxu0 %v636
        %v791 = vpop.f32.mrb[0].mxu0
        %v792 = vadd.f32 0.0, %v791
        %v793 = vpop.f32.mrb[0].mxu0
        %v794 = vpop.f32.mrb[0].mxu0
        %v795 = vadd.f32 0.0, %v794
        %v796 = vpop.f32.mrb[0].mxu0
        %797 = vdwg.mxu0
        %v798 = vpack.c.bf16 %v739, %v736
        %v799 = vpack.c.bf16 %v747, %v744
        %v800 = vpack.c.bf16 %v755, %v752
        %v801 = vpack.c.bf16 %v763, %v760
        %v802 = vpack.c.bf16 %v771, %v768
        %v803 = vpack.c.bf16 %v779, %v776
        %v804 = vpack.c.bf16 %v787, %v784
        %v805 = vpack.c.bf16 %v795, %v792
        %806 = vst [vmem:[#allocation2] sm:$0xff] %v798
        %807 = vst [vmem:[#allocation2 + $0x8] sm:$0xff] %v799
        %808 = vst [vmem:[#allocation2 + $0x10] sm:$0xff] %v800
        %809 = vst [vmem:[#allocation2 + $0x18] sm:$0xff] %v801
        %810 = vst [vmem:[#allocation2 + $0x20] sm:$0xff] %v802
        %811 = vst [vmem:[#allocation2 + $0x28] sm:$0xff] %v803
        %812 = vst [vmem:[#allocation2 + $0x30] sm:$0xff] %v804
        %813 = vst [vmem:[#allocation2 + $0x38] sm:$0xff] %v805
      $region48: #{mpnn_net_forward.1} parent=39 // pred_fallthru
        _
      %v814 = vld [vmem:[%s330] sm:$0xf]
      %v815 = vld [vmem:[%s330 + $0x4] sm:$0xf]
      %v816 = vld [vmem:[%s330 + $0x8] sm:$0xf]
      %v817 = vld [vmem:[%s330 + $0xc] sm:$0xf]
      %v818 = vld [vmem:[%s330 + $0x10] sm:$0xf]
      %v819 = vld [vmem:[%s330 + $0x14] sm:$0xf]
      %v820 = vld [vmem:[%s330 + $0x18] sm:$0xf]
      %v821 = vld [vmem:[%s330 + $0x1c] sm:$0xf]
      %v822 = vld [vmem:[%s330 + $0x20] sm:$0xf]
      %v823 = vld [vmem:[%s330 + $0x24] sm:$0xf]
      %v824 = vld [vmem:[%s330 + $0x28] sm:$0xf]
      %v825 = vld [vmem:[%s330 + $0x2c] sm:$0xf]
      %v826 = vld [vmem:[%s330 + $0x30] sm:$0xf]
      %v827 = vld [vmem:[%s330 + $0x34] sm:$0xf]
      %v828 = vld [vmem:[%s330 + $0x38] sm:$0xf]
      %v829 = vld [vmem:[%s330 + $0x3c] sm:$0xf]
      %v830 = vld [vmem:[#allocation2] sm:$0xff]
      %v831 = vld [vmem:[#allocation2 + $0x8] sm:$0xff]
      %v832 = vld [vmem:[#allocation2 + $0x10] sm:$0xff]
      %v833 = vld [vmem:[#allocation2 + $0x18] sm:$0xff]
      %v834 = vld [vmem:[#allocation2 + $0x20] sm:$0xff]
      %v835 = vld [vmem:[#allocation2 + $0x28] sm:$0xff]
      %v836 = vld [vmem:[#allocation2 + $0x30] sm:$0xff]
      %v837 = vld [vmem:[#allocation2 + $0x38] sm:$0xff]
      %v854 = vunpack.c.l.b16 %v814
      %v855 = vunpack.c.l.b16 %v815
      %v856 = vunpack.c.l.b16 %v816
      %v857 = vunpack.c.l.b16 %v817
      %v858 = vunpack.c.l.b16 %v818
      %v859 = vunpack.c.l.b16 %v819
      %v860 = vunpack.c.l.b16 %v820
      %v861 = vunpack.c.l.b16 %v821
      %v862 = vunpack.c.l.b16 %v822
      %v863 = vunpack.c.l.b16 %v823
      %v864 = vunpack.c.l.b16 %v824
      %v865 = vunpack.c.l.b16 %v825
      %v866 = vunpack.c.l.b16 %v826
      %v867 = vunpack.c.l.b16 %v827
      %v868 = vunpack.c.l.b16 %v828
      %v869 = vunpack.c.l.b16 %v829
      %v870 = vpack.c.b16 %v855, %v854
      %v871 = vpack.c.b16 %v857, %v856
      %v872 = vpack.c.b16 %v859, %v858
      %v873 = vpack.c.b16 %v861, %v860
      %v874 = vpack.c.b16 %v863, %v862
      %v875 = vpack.c.b16 %v865, %v864
      %v876 = vpack.c.b16 %v867, %v866
      %v877 = vpack.c.b16 %v869, %v868
      %886 = vmatprep.subr.bf16.mxu0 0
      %887 = vmatpush1.bf16.msra.mxu0 %v830
      %888 = vmatprep.subr.bf16.mxu0 0
      %889 = vmatpush1.bf16.msra.mxu0 %v831
      %890 = vmatprep.subr.bf16.mxu0 0
      %891 = vmatpush1.bf16.msra.mxu0 %v832
      %892 = vmatprep.subr.bf16.mxu0 0
      %893 = vmatpush1.bf16.msra.mxu0 %v833
      %894 = vmatprep.subr.bf16.mxu0 0
      %895 = vmatpush1.bf16.msra.mxu0 %v834
      %896 = vmatprep.subr.bf16.mxu0 0
      %897 = vmatpush1.bf16.msra.mxu0 %v835
      %898 = vmatprep.subr.bf16.mxu0 0
      %899 = vmatpush1.bf16.msra.mxu0 %v836
      %900 = vmatprep.subr.bf16.mxu0 0
      %901 = vmatpush1.bf16.msra.mxu0 %v837
      %902 = vmatprep.subr.bf16.mxu0 0
      %903 = vmatpush1.bf16.msra.mxu0 0
      %904 = vmatprep.subr.bf16.mxu0 0
      %905 = vmatpush1.bf16.msra.mxu0 0
      %906 = vmatprep.subr.bf16.mxu0 0
      %907 = vmatpush1.bf16.msra.mxu0 0
      %908 = vmatprep.subr.bf16.mxu0 0
      %909 = vmatpush1.bf16.msra.mxu0 0
      %910 = vmatprep.subr.bf16.mxu0 0
      %911 = vmatpush1.bf16.msra.mxu0 0
      %912 = vmatprep.subr.bf16.mxu0 0
      %913 = vmatpush1.bf16.msra.mxu0 0
      %914 = vmatprep.subr.bf16.mxu0 0
      %915 = vmatpush1.bf16.msra.mxu0 0
      %916 = vmatprep.subr.bf16.mxu0 0
      %917 = vmatpush1.bf16.msra.mxu0 0
      %918 = vmatprep.mubr.bf16.mxu0 0
      %919 = vmatmul.mubr.bf16.gmra.mrb[0].mxu0 %v870
      %v920 = vpop.f32.mrb[0].mxu0
      %v921 = vadd.f32 0.0, %v920
      %v922 = vpop.f32.mrb[0].mxu0
      %v923 = vpop.f32.mrb[0].mxu0
      %v924 = vadd.f32 0.0, %v923
      %v925 = vpop.f32.mrb[0].mxu0
      %926 = vmatprep.mubr.bf16.mxu0 0
      %927 = vmatmul.mubr.bf16.gmra.mrb[0].mxu0 %v871
      %v928 = vpop.f32.mrb[0].mxu0
      %v929 = vadd.f32 0.0, %v928
      %v930 = vpop.f32.mrb[0].mxu0
      %v931 = vpop.f32.mrb[0].mxu0
      %v932 = vadd.f32 0.0, %v931
      %v933 = vpop.f32.mrb[0].mxu0
      %934 = vmatprep.mubr.bf16.mxu0 0
      %935 = vmatmul.mubr.bf16.gmra.mrb[0].mxu0 %v872
      %v936 = vpop.f32.mrb[0].mxu0
      %v937 = vadd.f32 0.0, %v936
      %v938 = vpop.f32.mrb[0].mxu0
      %v939 = vpop.f32.mrb[0].mxu0
      %v940 = vadd.f32 0.0, %v939
      %v941 = vpop.f32.mrb[0].mxu0
      %942 = vmatprep.mubr.bf16.mxu0 0
      %943 = vmatmul.mubr.bf16.gmra.mrb[0].mxu0 %v873
      %v944 = vpop.f32.mrb[0].mxu0
      %v945 = vadd.f32 0.0, %v944
      %v946 = vpop.f32.mrb[0].mxu0
      %v947 = vpop.f32.mrb[0].mxu0
      %v948 = vadd.f32 0.0, %v947
      %v949 = vpop.f32.mrb[0].mxu0
      %950 = vmatprep.mubr.bf16.mxu0 0
      %951 = vmatmul.mubr.bf16.gmra.mrb[0].mxu0 %v874
      %v952 = vpop.f32.mrb[0].mxu0
      %v953 = vadd.f32 0.0, %v952
      %v954 = vpop.f32.mrb[0].mxu0
      %v955 = vpop.f32.mrb[0].mxu0
      %v956 = vadd.f32 0.0, %v955
      %v957 = vpop.f32.mrb[0].mxu0
      %958 = vmatprep.mubr.bf16.mxu0 0
      %959 = vmatmul.mubr.bf16.gmra.mrb[0].mxu0 %v875
      %v960 = vpop.f32.mrb[0].mxu0
      %v961 = vadd.f32 0.0, %v960
      %v962 = vpop.f32.mrb[0].mxu0
      %v963 = vpop.f32.mrb[0].mxu0
      %v964 = vadd.f32 0.0, %v963
      %v965 = vpop.f32.mrb[0].mxu0
      %966 = vmatprep.mubr.bf16.mxu0 0
      %967 = vmatmul.mubr.bf16.gmra.mrb[0].mxu0 %v876
      %v968 = vpop.f32.mrb[0].mxu0
      %v969 = vadd.f32 0.0, %v968
      %v970 = vpop.f32.mrb[0].mxu0
      %v971 = vpop.f32.mrb[0].mxu0
      %v972 = vadd.f32 0.0, %v971
      %v973 = vpop.f32.mrb[0].mxu0
      %974 = vmatprep.mubr.bf16.mxu0 0
      %975 = vmatmul.mubr.bf16.gmra.mrb[0].mxu0 %v877
      %v976 = vpop.f32.mrb[0].mxu0
      %v977 = vadd.f32 0.0, %v976
      %v978 = vpop.f32.mrb[0].mxu0
      %v979 = vpop.f32.mrb[0].mxu0
      %v980 = vadd.f32 0.0, %v979
      %v981 = vpop.f32.mrb[0].mxu0
      %982 = vdwg.mxu0
      %p983 = scmp.eq.s32.totalorder %s22, 0
      // Predicated region
      $region49: #{mpnn_net_forward.1} parent=39 // pred_check
        %p984 = pneg %p983
      $region50: #{mpnn_net_forward.1} parent=39 // pred_check_branch
        %986 = sbr.rel (%p984) target = $region52
      $region51: #{mpnn_net_forward.1} parent=39 // pred_region
        %s987 = scalar_lea.vmem [#allocation3], %s371
        %988 = vst [vmem:[%s987] sm:$0xff] %v921
        %989 = vst [vmem:[%s987 + $0x8] sm:$0xff] %v924
        %990 = vst [vmem:[%s987 + $0x10] sm:$0xff] %v929
        %991 = vst [vmem:[%s987 + $0x18] sm:$0xff] %v932
        %992 = vst [vmem:[%s987 + $0x20] sm:$0xff] %v937
        %993 = vst [vmem:[%s987 + $0x28] sm:$0xff] %v940
        %994 = vst [vmem:[%s987 + $0x30] sm:$0xff] %v945
        %995 = vst [vmem:[%s987 + $0x38] sm:$0xff] %v948
        %996 = vst [vmem:[%s987 + $0x40] sm:$0xff] %v953
        %997 = vst [vmem:[%s987 + $0x48] sm:$0xff] %v956
        %998 = vst [vmem:[%s987 + $0x50] sm:$0xff] %v961
        %999 = vst [vmem:[%s987 + $0x58] sm:$0xff] %v964
        %1000 = vst [vmem:[%s987 + $0x60] sm:$0xff] %v969
        %1001 = vst [vmem:[%s987 + $0x68] sm:$0xff] %v972
        %1002 = vst [vmem:[%s987 + $0x70] sm:$0xff] %v977
        %1003 = vst [vmem:[%s987 + $0x78] sm:$0xff] %v980
      $region52: #{mpnn_net_forward.1} parent=39 // pred_fallthru
        _
      %p1004 = scmp.gt.s32.totalorder %s22, 0
      // Predicated region
      $region53: #{mpnn_net_forward.1} parent=39 // pred_check
        %p1005 = pneg %p1004
      $region54: #{mpnn_net_forward.1} parent=39 // pred_check_branch
        %1007 = sbr.rel (%p1005) target = $region56
      $region55: #{mpnn_net_forward.1} parent=39 // pred_region
        %s1008 = scalar_lea.vmem [#allocation3], %s371
        %v1009 = vld [vmem:[%s1008] sm:$0xff]
        %v1010 = vld [vmem:[%s1008 + $0x8] sm:$0xff]
        %v1011 = vld [vmem:[%s1008 + $0x10] sm:$0xff]
        %v1012 = vld [vmem:[%s1008 + $0x18] sm:$0xff]
        %v1013 = vld [vmem:[%s1008 + $0x20] sm:$0xff]
        %v1014 = vld [vmem:[%s1008 + $0x28] sm:$0xff]
        %v1015 = vld [vmem:[%s1008 + $0x30] sm:$0xff]
        %v1016 = vld [vmem:[%s1008 + $0x38] sm:$0xff]
        %v1017 = vld [vmem:[%s1008 + $0x40] sm:$0xff]
        %v1018 = vld [vmem:[%s1008 + $0x48] sm:$0xff]
        %v1019 = vld [vmem:[%s1008 + $0x50] sm:$0xff]
        %v1020 = vld [vmem:[%s1008 + $0x58] sm:$0xff]
        %v1021 = vld [vmem:[%s1008 + $0x60] sm:$0xff]
        %v1022 = vld [vmem:[%s1008 + $0x68] sm:$0xff]
        %v1023 = vld [vmem:[%s1008 + $0x70] sm:$0xff]
        %v1024 = vld [vmem:[%s1008 + $0x78] sm:$0xff]
        %v1025 = vadd.f32 %v1009, %v921
        %v1026 = vadd.f32 %v1010, %v924
        %v1027 = vadd.f32 %v1011, %v929
        %v1028 = vadd.f32 %v1012, %v932
        %v1029 = vadd.f32 %v1013, %v937
        %v1030 = vadd.f32 %v1014, %v940
        %v1031 = vadd.f32 %v1015, %v945
        %v1032 = vadd.f32 %v1016, %v948
        %v1033 = vadd.f32 %v1017, %v953
        %v1034 = vadd.f32 %v1018, %v956
        %v1035 = vadd.f32 %v1019, %v961
        %v1036 = vadd.f32 %v1020, %v964
        %v1037 = vadd.f32 %v1021, %v969
        %v1038 = vadd.f32 %v1022, %v972
        %v1039 = vadd.f32 %v1023, %v977
        %v1040 = vadd.f32 %v1024, %v980
        %1041 = vst [vmem:[%s1008] sm:$0xff] %v1025
        %1042 = vst [vmem:[%s1008 + $0x8] sm:$0xff] %v1026
        %1043 = vst [vmem:[%s1008 + $0x10] sm:$0xff] %v1027
        %1044 = vst [vmem:[%s1008 + $0x18] sm:$0xff] %v1028
        %1045 = vst [vmem:[%s1008 + $0x20] sm:$0xff] %v1029
        %1046 = vst [vmem:[%s1008 + $0x28] sm:$0xff] %v1030
        %1047 = vst [vmem:[%s1008 + $0x30] sm:$0xff] %v1031
        %1048 = vst [vmem:[%s1008 + $0x38] sm:$0xff] %v1032
        %1049 = vst [vmem:[%s1008 + $0x40] sm:$0xff] %v1033
        %1050 = vst [vmem:[%s1008 + $0x48] sm:$0xff] %v1034
        %1051 = vst [vmem:[%s1008 + $0x50] sm:$0xff] %v1035
        %1052 = vst [vmem:[%s1008 + $0x58] sm:$0xff] %v1036
        %1053 = vst [vmem:[%s1008 + $0x60] sm:$0xff] %v1037
        %1054 = vst [vmem:[%s1008 + $0x68] sm:$0xff] %v1038
        %1055 = vst [vmem:[%s1008 + $0x70] sm:$0xff] %v1039
        %1056 = vst [vmem:[%s1008 + $0x78] sm:$0xff] %v1040
      $region56: #{mpnn_net_forward.1} parent=39 // pred_fallthru
        _
      %p1057 = pnand %p373, %p983
      %p1058 = pneg %p1057
      // Predicated region
      $region57: #{mpnn_net_forward.1} parent=39 // pred_check
        _
      $region58: #{mpnn_net_forward.1} parent=39 // pred_check_branch
        %1060 = sbr.rel (%p1057) target = $region60
      $region59: #{mpnn_net_forward.1} parent=39 // pred_region
        %s1061 = scalar_lea.vmem [#allocation3], %s371
        %v1062 = vld [vmem:[%s1061] sm:$0xff]
        %v1063 = vld [vmem:[%s1061 + $0x8] sm:$0xff]
        %v1064 = vld [vmem:[%s1061 + $0x10] sm:$0xff]
        %v1065 = vld [vmem:[%s1061 + $0x18] sm:$0xff]
        %v1066 = vld [vmem:[%s1061 + $0x20] sm:$0xff]
        %v1067 = vld [vmem:[%s1061 + $0x28] sm:$0xff]
        %v1068 = vld [vmem:[%s1061 + $0x30] sm:$0xff]
        %v1069 = vld [vmem:[%s1061 + $0x38] sm:$0xff]
        %v1070 = vld [vmem:[%s1061 + $0x40] sm:$0xff]
        %v1071 = vld [vmem:[%s1061 + $0x48] sm:$0xff]
        %v1072 = vld [vmem:[%s1061 + $0x50] sm:$0xff]
        %v1073 = vld [vmem:[%s1061 + $0x58] sm:$0xff]
        %v1074 = vld [vmem:[%s1061 + $0x60] sm:$0xff]
        %v1075 = vld [vmem:[%s1061 + $0x68] sm:$0xff]
        %v1076 = vld [vmem:[%s1061 + $0x70] sm:$0xff]
        %v1077 = vld [vmem:[%s1061 + $0x78] sm:$0xff]
        %v1078 = vld [vmem:[%s354] sm:$0xff]
        %v1079 = vld [vmem:[%s354 + $0x8] sm:$0xff]
        %v1080 = vld [vmem:[%s354 + $0x10] sm:$0xff]
        %v1081 = vld [vmem:[%s354 + $0x18] sm:$0xff]
        %v1082 = vld [vmem:[%s354 + $0x20] sm:$0xff]
        %v1083 = vld [vmem:[%s354 + $0x28] sm:$0xff]
        %v1084 = vld [vmem:[%s354 + $0x30] sm:$0xff]
        %v1085 = vld [vmem:[%s354 + $0x38] sm:$0xff]
        %v1086 = vld [vmem:[%s354 + $0x40] sm:$0xff]
        %v1087 = vld [vmem:[%s354 + $0x48] sm:$0xff]
        %v1088 = vld [vmem:[%s354 + $0x50] sm:$0xff]
        %v1089 = vld [vmem:[%s354 + $0x58] sm:$0xff]
        %v1090 = vld [vmem:[%s354 + $0x60] sm:$0xff]
        %v1091 = vld [vmem:[%s354 + $0x68] sm:$0xff]
        %v1092 = vld [vmem:[%s354 + $0x70] sm:$0xff]
        %v1093 = vld [vmem:[%s354 + $0x78] sm:$0xff]
        %1095 = vset.pattern.permute.xlu0 0
        %1096 = vperm.xlu0 %1095, %v1078
        %v1097 = vpop.permute.xlu0 %1096
        %1100 = vset.pattern.permute.xlu0 0
        %1101 = vperm.xlu0 %1100, %v1079
        %v1102 = vpop.permute.xlu0 %1101
        %1105 = vset.pattern.permute.xlu0 0
        %1106 = vperm.xlu0 %1105, %v1080
        %v1107 = vpop.permute.xlu0 %1106
        %1110 = vset.pattern.permute.xlu0 0
        %1111 = vperm.xlu0 %1110, %v1081
        %v1112 = vpop.permute.xlu0 %1111
        %1115 = vset.pattern.permute.xlu0 0
        %1116 = vperm.xlu0 %1115, %v1082
        %v1117 = vpop.permute.xlu0 %1116
        %1120 = vset.pattern.permute.xlu0 0
        %1121 = vperm.xlu0 %1120, %v1083
        %v1122 = vpop.permute.xlu0 %1121
        %1125 = vset.pattern.permute.xlu0 0
        %1126 = vperm.xlu0 %1125, %v1084
        %v1127 = vpop.permute.xlu0 %1126
        %1130 = vset.pattern.permute.xlu0 0
        %1131 = vperm.xlu0 %1130, %v1085
        %v1132 = vpop.permute.xlu0 %1131
        %1135 = vset.pattern.permute.xlu0 0
        %1136 = vperm.xlu0 %1135, %v1086
        %v1137 = vpop.permute.xlu0 %1136
        %1140 = vset.pattern.permute.xlu0 0
        %1141 = vperm.xlu0 %1140, %v1087
        %v1142 = vpop.permute.xlu0 %1141
        %1145 = vset.pattern.permute.xlu0 0
        %1146 = vperm.xlu0 %1145, %v1088
        %v1147 = vpop.permute.xlu0 %1146
        %1150 = vset.pattern.permute.xlu0 0
        %1151 = vperm.xlu0 %1150, %v1089
        %v1152 = vpop.permute.xlu0 %1151
        %1155 = vset.pattern.permute.xlu0 0
        %1156 = vperm.xlu0 %1155, %v1090
        %v1157 = vpop.permute.xlu0 %1156
        %1160 = vset.pattern.permute.xlu0 0
        %1161 = vperm.xlu0 %1160, %v1091
        %v1162 = vpop.permute.xlu0 %1161
        %1165 = vset.pattern.permute.xlu0 0
        %1166 = vperm.xlu0 %1165, %v1092
        %v1167 = vpop.permute.xlu0 %1166
        %1170 = vset.pattern.permute.xlu0 0
        %1171 = vperm.xlu0 %1170, %v1093
        %v1172 = vpop.permute.xlu0 %1171
        %v1174 = vmul.f32 %v1062, %v1097
        %v1175 = vmul.f32 %v1063, %v1102
        %v1176 = vmul.f32 %v1064, %v1107
        %v1177 = vmul.f32 %v1065, %v1112
        %v1178 = vmul.f32 %v1066, %v1117
        %v1179 = vmul.f32 %v1067, %v1122
        %v1180 = vmul.f32 %v1068, %v1127
        %v1181 = vmul.f32 %v1069, %v1132
        %v1182 = vmul.f32 %v1070, %v1137
        %v1183 = vmul.f32 %v1071, %v1142
        %v1184 = vmul.f32 %v1072, %v1147
        %v1185 = vmul.f32 %v1073, %v1152
        %v1186 = vmul.f32 %v1074, %v1157
        %v1187 = vmul.f32 %v1075, %v1162
        %v1188 = vmul.f32 %v1076, %v1167
        %v1189 = vmul.f32 %v1077, %v1172
        %v1190 = vld [vmem:[%s349] sm:$0x1]
        %v1192 = vlaneseq
        %v1193 = vshrl.u32 %v1192, 7
        %v1194 = vsub.s32 0, %v1193
        %v1195 = vrot.slane %v1190, %v1194
        %v1197 = vadd.f32 %v1174, %v1195
        %v1198 = vadd.f32 %v1175, %v1195
        %v1199 = vadd.f32 %v1176, %v1195
        %v1200 = vadd.f32 %v1177, %v1195
        %v1201 = vadd.f32 %v1178, %v1195
        %v1202 = vadd.f32 %v1179, %v1195
        %v1203 = vadd.f32 %v1180, %v1195
        %v1204 = vadd.f32 %v1181, %v1195
        %v1205 = vadd.f32 %v1182, %v1195
        %v1206 = vadd.f32 %v1183, %v1195
        %v1207 = vadd.f32 %v1184, %v1195
        %v1208 = vadd.f32 %v1185, %v1195
        %v1209 = vadd.f32 %v1186, %v1195
        %v1210 = vadd.f32 %v1187, %v1195
        %v1211 = vadd.f32 %v1188, %v1195
        %v1212 = vadd.f32 %v1189, %v1195
        %v1213 = vmax.f32 %v1197, 0.0
        %v1214 = vmax.f32 %v1198, 0.0
        %v1215 = vmax.f32 %v1199, 0.0
        %v1216 = vmax.f32 %v1200, 0.0
        %v1217 = vmax.f32 %v1201, 0.0
        %v1218 = vmax.f32 %v1202, 0.0
        %v1219 = vmax.f32 %v1203, 0.0
        %v1220 = vmax.f32 %v1204, 0.0
        %v1221 = vmax.f32 %v1205, 0.0
        %v1222 = vmax.f32 %v1206, 0.0
        %v1223 = vmax.f32 %v1207, 0.0
        %v1224 = vmax.f32 %v1208, 0.0
        %v1225 = vmax.f32 %v1209, 0.0
        %v1226 = vmax.f32 %v1210, 0.0
        %v1227 = vmax.f32 %v1211, 0.0
        %v1228 = vmax.f32 %v1212, 0.0
        %v1229 = vpack.c.bf16 %v1214, %v1213
        %v1230 = vpack.c.bf16 %v1216, %v1215
        %v1231 = vpack.c.bf16 %v1218, %v1217
        %v1232 = vpack.c.bf16 %v1220, %v1219
        %v1233 = vpack.c.bf16 %v1222, %v1221
        %v1234 = vpack.c.bf16 %v1224, %v1223
        %v1235 = vpack.c.bf16 %v1226, %v1225
        %v1236 = vpack.c.bf16 %v1228, %v1227
        %s1237 = sshra.s32 %s371, 4
        %s1238 = sand.u32 %s371, 15
        %s1239 = smul.addr %s1237, 8
        %s1240 = scalar_lea.vmem [#allocation4], %s1239
        %1241 = vst [vmem:[%s1240] sm:$0xff] %v1229
        %1242 = vst [vmem:[%s1240 + $0x8] sm:$0xff] %v1230
        %1243 = vst [vmem:[%s1240 + $0x10] sm:$0xff] %v1231
        %1244 = vst [vmem:[%s1240 + $0x18] sm:$0xff] %v1232
        %1245 = vst [vmem:[%s1240 + $0x20] sm:$0xff] %v1233
        %1246 = vst [vmem:[%s1240 + $0x28] sm:$0xff] %v1234
        %1247 = vst [vmem:[%s1240 + $0x30] sm:$0xff] %v1235
        %1248 = vst [vmem:[%s1240 + $0x38] sm:$0xff] %v1236
      $region60: #{mpnn_net_forward.1} parent=39 // pred_fallthru
        _
      %p1249 = pnand %p619, %p983
      %p1250 = pneg %p1249
      // Predicated region
      $region61: #{mpnn_net_forward.1} parent=39 // pred_check
        _
      $region62: #{mpnn_net_forward.1} parent=39 // pred_check_branch
        %1252 = sbr.rel (%p1249) target = $region64
      $region63: #{mpnn_net_forward.1} parent=39 // pred_region
        %s1253 = scalar_lea.vmem [#allocation3], %s371
        %v1254 = vld [vmem:[%s1253] sm:$0xff]
        %v1255 = vld [vmem:[%s1253 + $0x8] sm:$0xff]
        %v1256 = vld [vmem:[%s1253 + $0x10] sm:$0xff]
        %v1257 = vld [vmem:[%s1253 + $0x18] sm:$0xff]
        %v1258 = vld [vmem:[%s1253 + $0x20] sm:$0xff]
        %v1259 = vld [vmem:[%s1253 + $0x28] sm:$0xff]
        %v1260 = vld [vmem:[%s1253 + $0x30] sm:$0xff]
        %v1261 = vld [vmem:[%s1253 + $0x38] sm:$0xff]
        %v1262 = vld [vmem:[%s1253 + $0x40] sm:$0xff]
        %v1263 = vld [vmem:[%s1253 + $0x48] sm:$0xff]
        %v1264 = vld [vmem:[%s1253 + $0x50] sm:$0xff]
        %v1265 = vld [vmem:[%s1253 + $0x58] sm:$0xff]
        %v1266 = vld [vmem:[%s1253 + $0x60] sm:$0xff]
        %v1267 = vld [vmem:[%s1253 + $0x68] sm:$0xff]
        %v1268 = vld [vmem:[%s1253 + $0x70] sm:$0xff]
        %v1269 = vld [vmem:[%s1253 + $0x78] sm:$0xff]
        %v1270 = vld [vmem:[%s354] sm:$0xff]
        %v1271 = vld [vmem:[%s354 + $0x8] sm:$0xff]
        %v1272 = vld [vmem:[%s354 + $0x10] sm:$0xff]
        %v1273 = vld [vmem:[%s354 + $0x18] sm:$0xff]
        %v1274 = vld [vmem:[%s354 + $0x20] sm:$0xff]
        %v1275 = vld [vmem:[%s354 + $0x28] sm:$0xff]
        %v1276 = vld [vmem:[%s354 + $0x30] sm:$0xff]
        %v1277 = vld [vmem:[%s354 + $0x38] sm:$0xff]
        %v1278 = vld [vmem:[%s354 + $0x40] sm:$0xff]
        %v1279 = vld [vmem:[%s354 + $0x48] sm:$0xff]
        %v1280 = vld [vmem:[%s354 + $0x50] sm:$0xff]
        %v1281 = vld [vmem:[%s354 + $0x58] sm:$0xff]
        %v1282 = vld [vmem:[%s354 + $0x60] sm:$0xff]
        %v1283 = vld [vmem:[%s354 + $0x68] sm:$0xff]
        %v1284 = vld [vmem:[%s354 + $0x70] sm:$0xff]
        %v1285 = vld [vmem:[%s354 + $0x78] sm:$0xff]
        %1287 = vset.pattern.permute.xlu0 0
        %1288 = vperm.xlu0 %1287, %v1270
        %v1289 = vpop.permute.xlu0 %1288
        %1292 = vset.pattern.permute.xlu0 0
        %1293 = vperm.xlu0 %1292, %v1271
        %v1294 = vpop.permute.xlu0 %1293
        %1297 = vset.pattern.permute.xlu0 0
        %1298 = vperm.xlu0 %1297, %v1272
        %v1299 = vpop.permute.xlu0 %1298
        %1302 = vset.pattern.permute.xlu0 0
        %1303 = vperm.xlu0 %1302, %v1273
        %v1304 = vpop.permute.xlu0 %1303
        %1307 = vset.pattern.permute.xlu0 0
        %1308 = vperm.xlu0 %1307, %v1274
        %v1309 = vpop.permute.xlu0 %1308
        %1312 = vset.pattern.permute.xlu0 0
        %1313 = vperm.xlu0 %1312, %v1275
        %v1314 = vpop.permute.xlu0 %1313
        %1317 = vset.pattern.permute.xlu0 0
        %1318 = vperm.xlu0 %1317, %v1276
        %v1319 = vpop.permute.xlu0 %1318
        %1322 = vset.pattern.permute.xlu0 0
        %1323 = vperm.xlu0 %1322, %v1277
        %v1324 = vpop.permute.xlu0 %1323
        %1327 = vset.pattern.permute.xlu0 0
        %1328 = vperm.xlu0 %1327, %v1278
        %v1329 = vpop.permute.xlu0 %1328
        %1332 = vset.pattern.permute.xlu0 0
        %1333 = vperm.xlu0 %1332, %v1279
        %v1334 = vpop.permute.xlu0 %1333
        %1337 = vset.pattern.permute.xlu0 0
        %1338 = vperm.xlu0 %1337, %v1280
        %v1339 = vpop.permute.xlu0 %1338
        %1342 = vset.pattern.permute.xlu0 0
        %1343 = vperm.xlu0 %1342, %v1281
        %v1344 = vpop.permute.xlu0 %1343
        %1347 = vset.pattern.permute.xlu0 0
        %1348 = vperm.xlu0 %1347, %v1282
        %v1349 = vpop.permute.xlu0 %1348
        %1352 = vset.pattern.permute.xlu0 0
        %1353 = vperm.xlu0 %1352, %v1283
        %v1354 = vpop.permute.xlu0 %1353
        %1357 = vset.pattern.permute.xlu0 0
        %1358 = vperm.xlu0 %1357, %v1284
        %v1359 = vpop.permute.xlu0 %1358
        %1362 = vset.pattern.permute.xlu0 0
        %1363 = vperm.xlu0 %1362, %v1285
        %v1364 = vpop.permute.xlu0 %1363
        %v1366 = vmul.f32 %v1254, %v1289
        %v1367 = vmul.f32 %v1255, %v1294
        %v1368 = vmul.f32 %v1256, %v1299
        %v1369 = vmul.f32 %v1257, %v1304
        %v1370 = vmul.f32 %v1258, %v1309
        %v1371 = vmul.f32 %v1259, %v1314
        %v1372 = vmul.f32 %v1260, %v1319
        %v1373 = vmul.f32 %v1261, %v1324
        %v1374 = vmul.f32 %v1262, %v1329
        %v1375 = vmul.f32 %v1263, %v1334
        %v1376 = vmul.f32 %v1264, %v1339
        %v1377 = vmul.f32 %v1265, %v1344
        %v1378 = vmul.f32 %v1266, %v1349
        %v1379 = vmul.f32 %v1267, %v1354
        %v1380 = vmul.f32 %v1268, %v1359
        %v1381 = vmul.f32 %v1269, %v1364
        %v1382 = vld [vmem:[%s349] sm:$0x1]
        %v1384 = vlaneseq
        %v1385 = vshrl.u32 %v1384, 7
        %v1386 = vsub.s32 0, %v1385
        %v1387 = vrot.slane %v1382, %v1386
        %v1389 = vadd.f32 %v1366, %v1387
        %v1390 = vadd.f32 %v1367, %v1387
        %v1391 = vadd.f32 %v1368, %v1387
        %v1392 = vadd.f32 %v1369, %v1387
        %v1393 = vadd.f32 %v1370, %v1387
        %v1394 = vadd.f32 %v1371, %v1387
        %v1395 = vadd.f32 %v1372, %v1387
        %v1396 = vadd.f32 %v1373, %v1387
        %v1397 = vadd.f32 %v1374, %v1387
        %v1398 = vadd.f32 %v1375, %v1387
        %v1399 = vadd.f32 %v1376, %v1387
        %v1400 = vadd.f32 %v1377, %v1387
        %v1401 = vadd.f32 %v1378, %v1387
        %v1402 = vadd.f32 %v1379, %v1387
        %v1403 = vadd.f32 %v1380, %v1387
        %v1404 = vadd.f32 %v1381, %v1387
        %v1405 = vlaneseq
        %v1406 = vand.u32 %v1405, 127
        %vm1407 = vcmp.lt.s32.totalorder %v1406, 8
        %v1408 = vsel %vm1407, %v1389, -inf
        %v1409 = vsel %vm1407, %v1390, -inf
        %v1410 = vsel %vm1407, %v1391, -inf
        %v1411 = vsel %vm1407, %v1392, -inf
        %v1412 = vsel %vm1407, %v1393, -inf
        %v1413 = vsel %vm1407, %v1394, -inf
        %v1414 = vsel %vm1407, %v1395, -inf
        %v1415 = vsel %vm1407, %v1396, -inf
        %v1416 = vsel %vm1407, %v1397, -inf
        %v1417 = vsel %vm1407, %v1398, -inf
        %v1418 = vsel %vm1407, %v1399, -inf
        %v1419 = vsel %vm1407, %v1400, -inf
        %v1420 = vsel %vm1407, %v1401, -inf
        %v1421 = vsel %vm1407, %v1402, -inf
        %v1422 = vsel %vm1407, %v1403, -inf
        %v1423 = vsel %vm1407, %v1404, -inf
        %1424 = vmax.xlane.f32.xlu0 %v1408
        %v1425 = vpop.xlane.xlu0 %1424
        %1426 = vmax.xlane.f32.xlu0 %v1409
        %v1427 = vpop.xlane.xlu0 %1426
        %1428 = vmax.xlane.f32.xlu0 %v1410
        %v1429 = vpop.xlane.xlu0 %1428
        %1430 = vmax.xlane.f32.xlu0 %v1411
        %v1431 = vpop.xlane.xlu0 %1430
        %1432 = vmax.xlane.f32.xlu0 %v1412
        %v1433 = vpop.xlane.xlu0 %1432
        %1434 = vmax.xlane.f32.xlu0 %v1413
        %v1435 = vpop.xlane.xlu0 %1434
        %1436 = vmax.xlane.f32.xlu0 %v1414
        %v1437 = vpop.xlane.xlu0 %1436
        %1438 = vmax.xlane.f32.xlu0 %v1415
        %v1439 = vpop.xlane.xlu0 %1438
        %1440 = vmax.xlane.f32.xlu0 %v1416
        %v1441 = vpop.xlane.xlu0 %1440
        %1442 = vmax.xlane.f32.xlu0 %v1417
        %v1443 = vpop.xlane.xlu0 %1442
        %1444 = vmax.xlane.f32.xlu0 %v1418
        %v1445 = vpop.xlane.xlu0 %1444
        %1446 = vmax.xlane.f32.xlu0 %v1419
        %v1447 = vpop.xlane.xlu0 %1446
        %1448 = vmax.xlane.f32.xlu0 %v1420
        %v1449 = vpop.xlane.xlu0 %1448
        %1450 = vmax.xlane.f32.xlu0 %v1421
        %v1451 = vpop.xlane.xlu0 %1450
        %1452 = vmax.xlane.f32.xlu0 %v1422
        %v1453 = vpop.xlane.xlu0 %1452
        %1454 = vmax.xlane.f32.xlu0 %v1423
        %v1455 = vpop.xlane.xlu0 %1454
        %v1456 = vsub.f32 %v1408, %v1425
        %v1457 = vsub.f32 %v1409, %v1427
        %v1458 = vsub.f32 %v1410, %v1429
        %v1459 = vsub.f32 %v1411, %v1431
        %v1460 = vsub.f32 %v1412, %v1433
        %v1461 = vsub.f32 %v1413, %v1435
        %v1462 = vsub.f32 %v1414, %v1437
        %v1463 = vsub.f32 %v1415, %v1439
        %v1464 = vsub.f32 %v1416, %v1441
        %v1465 = vsub.f32 %v1417, %v1443
        %v1466 = vsub.f32 %v1418, %v1445
        %v1467 = vsub.f32 %v1419, %v1447
        %v1468 = vsub.f32 %v1420, %v1449
        %v1469 = vsub.f32 %v1421, %v1451
        %v1470 = vsub.f32 %v1422, %v1453
        %v1471 = vsub.f32 %v1423, %v1455
        %v1472 = vmul.f32 %v1456, 1.442695
        %v1473 = vpow.pop %v1472
        %v1474 = vmul.f32 %v1457, 1.442695
        %v1475 = vpow.pop %v1474
        %v1476 = vmul.f32 %v1458, 1.442695
        %v1477 = vpow.pop %v1476
        %v1478 = vmul.f32 %v1459, 1.442695
        %v1479 = vpow.pop %v1478
        %v1480 = vmul.f32 %v1460, 1.442695
        %v1481 = vpow.pop %v1480
        %v1482 = vmul.f32 %v1461, 1.442695
        %v1483 = vpow.pop %v1482
        %v1484 = vmul.f32 %v1462, 1.442695
        %v1485 = vpow.pop %v1484
        %v1486 = vmul.f32 %v1463, 1.442695
        %v1487 = vpow.pop %v1486
        %v1488 = vmul.f32 %v1464, 1.442695
        %v1489 = vpow.pop %v1488
        %v1490 = vmul.f32 %v1465, 1.442695
        %v1491 = vpow.pop %v1490
        %v1492 = vmul.f32 %v1466, 1.442695
        %v1493 = vpow.pop %v1492
        %v1494 = vmul.f32 %v1467, 1.442695
        %v1495 = vpow.pop %v1494
        %v1496 = vmul.f32 %v1468, 1.442695
        %v1497 = vpow.pop %v1496
        %v1498 = vmul.f32 %v1469, 1.442695
        %v1499 = vpow.pop %v1498
        %v1500 = vmul.f32 %v1470, 1.442695
        %v1501 = vpow.pop %v1500
        %v1502 = vmul.f32 %v1471, 1.442695
        %v1503 = vpow.pop %v1502
        %1504 = vadd.xlane.f32.xlu0 %v1473
        %v1505 = vpop.xlane.xlu0 %1504
        %1506 = vadd.xlane.f32.xlu0 %v1475
        %v1507 = vpop.xlane.xlu0 %1506
        %1508 = vadd.xlane.f32.xlu0 %v1477
        %v1509 = vpop.xlane.xlu0 %1508
        %1510 = vadd.xlane.f32.xlu0 %v1479
        %v1511 = vpop.xlane.xlu0 %1510
        %1512 = vadd.xlane.f32.xlu0 %v1481
        %v1513 = vpop.xlane.xlu0 %1512
        %1514 = vadd.xlane.f32.xlu0 %v1483
        %v1515 = vpop.xlane.xlu0 %1514
        %1516 = vadd.xlane.f32.xlu0 %v1485
        %v1517 = vpop.xlane.xlu0 %1516
        %1518 = vadd.xlane.f32.xlu0 %v1487
        %v1519 = vpop.xlane.xlu0 %1518
        %1520 = vadd.xlane.f32.xlu0 %v1489
        %v1521 = vpop.xlane.xlu0 %1520
        %1522 = vadd.xlane.f32.xlu0 %v1491
        %v1523 = vpop.xlane.xlu0 %1522
        %1524 = vadd.xlane.f32.xlu0 %v1493
        %v1525 = vpop.xlane.xlu0 %1524
        %1526 = vadd.xlane.f32.xlu0 %v1495
        %v1527 = vpop.xlane.xlu0 %1526
        %1528 = vadd.xlane.f32.xlu0 %v1497
        %v1529 = vpop.xlane.xlu0 %1528
        %1530 = vadd.xlane.f32.xlu0 %v1499
        %v1531 = vpop.xlane.xlu0 %1530
        %1532 = vadd.xlane.f32.xlu0 %v1501
        %v1533 = vpop.xlane.xlu0 %1532
        %1534 = vadd.xlane.f32.xlu0 %v1503
        %v1535 = vpop.xlane.xlu0 %1534
        %v1536 = vlog2.pop %v1505
        %v1537 = vmul.f32 %v1536, 0.6931472
        %v1538 = vlog2.pop %v1507
        %v1539 = vmul.f32 %v1538, 0.6931472
        %v1540 = vlog2.pop %v1509
        %v1541 = vmul.f32 %v1540, 0.6931472
        %v1542 = vlog2.pop %v1511
        %v1543 = vmul.f32 %v1542, 0.6931472
        %v1544 = vlog2.pop %v1513
        %v1545 = vmul.f32 %v1544, 0.6931472
        %v1546 = vlog2.pop %v1515
        %v1547 = vmul.f32 %v1546, 0.6931472
        %v1548 = vlog2.pop %v1517
        %v1549 = vmul.f32 %v1548, 0.6931472
        %v1550 = vlog2.pop %v1519
        %v1551 = vmul.f32 %v1550, 0.6931472
        %v1552 = vlog2.pop %v1521
        %v1553 = vmul.f32 %v1552, 0.6931472
        %v1554 = vlog2.pop %v1523
        %v1555 = vmul.f32 %v1554, 0.6931472
        %v1556 = vlog2.pop %v1525
        %v1557 = vmul.f32 %v1556, 0.6931472
        %v1558 = vlog2.pop %v1527
        %v1559 = vmul.f32 %v1558, 0.6931472
        %v1560 = vlog2.pop %v1529
        %v1561 = vmul.f32 %v1560, 0.6931472
        %v1562 = vlog2.pop %v1531
        %v1563 = vmul.f32 %v1562, 0.6931472
        %v1564 = vlog2.pop %v1533
        %v1565 = vmul.f32 %v1564, 0.6931472
        %v1566 = vlog2.pop %v1535
        %v1567 = vmul.f32 %v1566, 0.6931472
        %v1568 = vsub.f32 %v1456, %v1537
        %v1569 = vsub.f32 %v1457, %v1539
        %v1570 = vsub.f32 %v1458, %v1541
        %v1571 = vsub.f32 %v1459, %v1543
        %v1572 = vsub.f32 %v1460, %v1545
        %v1573 = vsub.f32 %v1461, %v1547
        %v1574 = vsub.f32 %v1462, %v1549
        %v1575 = vsub.f32 %v1463, %v1551
        %v1576 = vsub.f32 %v1464, %v1553
        %v1577 = vsub.f32 %v1465, %v1555
        %v1578 = vsub.f32 %v1466, %v1557
        %v1579 = vsub.f32 %v1467, %v1559
        %v1580 = vsub.f32 %v1468, %v1561
        %v1581 = vsub.f32 %v1469, %v1563
        %v1582 = vsub.f32 %v1470, %v1565
        %v1583 = vsub.f32 %v1471, %v1567
        %v1584 = vsel %vm1407, %v1568, 0.0
        %v1585 = vsel %vm1407, %v1569, 0.0
        %v1586 = vsel %vm1407, %v1570, 0.0
        %v1587 = vsel %vm1407, %v1571, 0.0
        %v1588 = vsel %vm1407, %v1572, 0.0
        %v1589 = vsel %vm1407, %v1573, 0.0
        %v1590 = vsel %vm1407, %v1574, 0.0
        %v1591 = vsel %vm1407, %v1575, 0.0
        %v1592 = vsel %vm1407, %v1576, 0.0
        %v1593 = vsel %vm1407, %v1577, 0.0
        %v1594 = vsel %vm1407, %v1578, 0.0
        %v1595 = vsel %vm1407, %v1579, 0.0
        %v1596 = vsel %vm1407, %v1580, 0.0
        %v1597 = vsel %vm1407, %v1581, 0.0
        %v1598 = vsel %vm1407, %v1582, 0.0
        %v1599 = vsel %vm1407, %v1583, 0.0
        %1600 = vst [vmem:[%s364] sm:$0xff] %v1584
        %1601 = vst [vmem:[%s364 + $0x8] sm:$0xff] %v1585
        %1602 = vst [vmem:[%s364 + $0x10] sm:$0xff] %v1586
        %1603 = vst [vmem:[%s364 + $0x18] sm:$0xff] %v1587
        %1604 = vst [vmem:[%s364 + $0x20] sm:$0xff] %v1588
        %1605 = vst [vmem:[%s364 + $0x28] sm:$0xff] %v1589
        %1606 = vst [vmem:[%s364 + $0x30] sm:$0xff] %v1590
        %1607 = vst [vmem:[%s364 + $0x38] sm:$0xff] %v1591
        %1608 = vst [vmem:[%s364 + $0x40] sm:$0xff] %v1592
        %1609 = vst [vmem:[%s364 + $0x48] sm:$0xff] %v1593
        %1610 = vst [vmem:[%s364 + $0x50] sm:$0xff] %v1594
        %1611 = vst [vmem:[%s364 + $0x58] sm:$0xff] %v1595
        %1612 = vst [vmem:[%s364 + $0x60] sm:$0xff] %v1596
        %1613 = vst [vmem:[%s364 + $0x68] sm:$0xff] %v1597
        %1614 = vst [vmem:[%s364 + $0x70] sm:$0xff] %v1598
        %1615 = vst [vmem:[%s364 + $0x78] sm:$0xff] %v1599
      $region64: #{mpnn_net_forward.1} parent=39 // pred_fallthru
        _
      %s1616 = smul.u32 %s23, %s21
      %p1617 = scmp.eq.s32.totalorder %s22, 0
      %s1618 = scalar_select %p1617, 1, 0
      %s1619 = smul.u32 %s1616, %s1618
      %s1620 = smul.u32 16, %s1619
      %p1621 = scmp.lt.s32.totalorder %s1620, 15
      %s1622 = scalar_select %p1621, %s1620, 15
      %s1623 = smul.addr %s1622, 8
      %s1624 = scalar_lea.vmem %s5, %s1623
      // Predicated region
      $region65: #{mpnn_net_forward.1} parent=39 // pred_check
        %p1625 = pneg %p197
      $region66: #{mpnn_net_forward.1} parent=39 // pred_check_branch
        %1627 = sbr.rel (%p1625) target = $region68
      $region67: #{mpnn_net_forward.1} parent=39 // pred_region
        %s1628 = smul.u32 %s23, %s21
        %p1629 = scmp.eq.s32.totalorder %s22, 0
        %s1630 = scalar_select %p1629, 1, 0
        %s1631 = smul.u32 %s1628, %s1630
        %s1632 = smul.u32 16, %s1631
      $region68: #{mpnn_net_forward.1} parent=39 // pred_fallthru
        _
    $region40: #{mpnn_net_forward.1} parent=5 // pred_fallthru
      _
    %p1633 = scmp.le.s32.totalorder 2, %s11
    // Predicated region
    $region69: #{mpnn_net_forward.1} parent=5 // pred_check
      %p1634 = pneg %p1633
    $region70: #{mpnn_net_forward.1} parent=5 // pred_check_branch
      %1636 = sbr.rel (%p1634) target = $region72
    $region71: #{mpnn_net_forward.1} parent=5 // pred_region
      %s1637 = ssub.s32 %s11, 2
      // Predicated region
      $region73: #{mpnn_net_forward.1} parent=71 // pred_check
        %p1638 = pneg %p203
      $region74: #{mpnn_net_forward.1} parent=71 // pred_check_branch
        %1640 = sbr.rel (%p1638) target = $region76
      $region75: #{mpnn_net_forward.1} parent=71 // pred_region
        %s1641 = smul.u32 %s26, %s24
        %p1642 = scmp.eq.s32.totalorder %s25, 0
        %s1643 = scalar_select %p1642, 1, 0
        %s1644 = smul.u32 %s1641, %s1643
        %s1645 = smul.u32 16, %s1644
        %p1646 = scmp.lt.s32.totalorder %s1645, 15
        %s1647 = scalar_select %p1646, %s1645, 15
        %s1648 = smul.addr %s1647, 8
        %s1649 = scalar_lea.vmem %s5, %s1648
      $region76: #{mpnn_net_forward.1} parent=71 // pred_fallthru
        _
    $region72: #{mpnn_net_forward.1} parent=5 // pred_fallthru
      _
  $region6: #{mpnn_net_forward.1} parent=0 // loop_footer
    %s15 = sadd.s32 1, %s11
  $region7: #{mpnn_net_forward.1} parent=0 // loop_footer_branch
    %10 = sbr.rel target = $region3
  $region8: #{mpnn_net_forward.1} parent=0 // loop_exit
    _

</llo_original>
